<compile_context>
chip_gen: v7x
topology: tpu7x:2x2x1
jax: 0.10.0
libtpu: 0.0.40
codegen_flags: <defaults>
</compile_context>

<pallas_src>
import functools

import jax
import jax.numpy as jnp
from jax import lax
from jax.experimental import pallas as pl
from jax.experimental.pallas import tpu as pltpu

NEG_SLOPE = 0.01         # nn.LeakyReLU default negative_slope
DILATIONS = (1, 2, 4, 8)


def _leaky(x):
    return jnp.where(x > 0, x, NEG_SLOPE * x)


def squeeze_conv_kernel(x_ref, coords_ref, w_proj_ref, b_proj_ref, w_dw_ref,
                        b_dw_ref, w_out_ref, b_out_ref, o_ref,
                        *, H, W, hidden, dilations):
    C, lanes = o_ref.shape
    xblk = x_ref[...].astype(jnp.float32)                       # (C, lanes)

    # ---- 1x1 projection conv on the MXU: (hidden, C) @ (C, lanes) ----
    proj = jnp.dot(w_proj_ref[...], xblk,
                   preferred_element_type=jnp.float32)          # (hidden, lanes)
    proj = proj + b_proj_ref[...]                               # (hidden, 1) bcast

    # Per-lane (y, x) coordinates (precomputed in the wrapper, periodic with
    # period H*W so they are valid for every batch element packed on lanes).
    yc = coords_ref[0:1, :]                                     # (1, lanes) int32
    xc = coords_ref[1:2, :]

    out_acc = jnp.zeros((C, lanes), jnp.float32)

    # ---- depthwise dilated 3x3 branches; 1x1 out-conv fused per dilation ----
    for di, d in enumerate(dilations):
        # boundary masks for this dilation ('same' zero padding)
        x_ok = {-1: xc >= d, 0: None, 1: xc < W - d}
        y_ok = {-1: yc >= d, 0: None, 1: yc < H - d}

        acc = jnp.zeros((hidden, lanes), jnp.float32)
        for i in (-1, 0, 1):
            for j in (-1, 0, 1):
                tap = (i + 1) * 3 + (j + 1)
                k = di * 9 + tap
                wcol = w_dw_ref[:, k:k + 1]                     # (hidden, 1)
                off = d * (i * W + j)                           # lane offset
                if off == 0:
                    shifted = proj
                else:
                    shifted = pltpu.roll(proj, (-off) % lanes, 1)
                    masks = [m for m in (y_ok[i], x_ok[j]) if m is not None]
                    mask = masks[0] if len(masks) == 1 else (masks[0] & masks[1])
                    shifted = jnp.where(mask, shifted, 0.0)
                acc = acc + wcol * shifted
        branch = _leaky(acc + b_dw_ref[:, di:di + 1])           # (hidden, lanes)

        # fused 1x1 out-conv contribution (BatchNorm folded into w_out/b_out)
        w_out_d = w_out_ref[:, di * hidden:(di + 1) * hidden]   # (C, hidden)
        out_acc = out_acc + jnp.dot(w_out_d, branch,
                                    preferred_element_type=jnp.float32)

    out = _leaky(out_acc + b_out_ref[...])                      # bias + LeakyReLU
    o_ref[...] = (out + xblk).astype(o_ref.dtype)               # residual add


def _const_spec(a):
    zeros = (0,) * a.ndim
    return pl.BlockSpec(a.shape, lambda i, _z=zeros: _z)


def _pick_batch_block(B, HW, target_lanes=1024):
    """Largest batch block with lane width <= target, preferring >= 2 grid
    steps (v7x megacore) and 128-lane-aligned blocks."""
    cands = [c for c in range(1, B + 1)
             if B % c == 0 and ((c * HW) % 128 == 0 or c == B)]
    multi = [c for c in cands if B // c >= 2] or cands
    fitting = [c for c in multi if c * HW <= target_lanes]
    return max(fitting) if fitting else min(multi)


def squeeze_convolution(x, params, *, dilations=DILATIONS):
    B, C, H, W = x.shape
    hidden = params["w_proj"].shape[0]
    nd = len(dilations)
    HW = H * W

    # ---- fold BatchNorm (eval / running stats) into the 1x1 out-conv ----
    bn_scale = params["bn_scale"].astype(jnp.float32)
    bn_shift = params["bn_shift"].astype(jnp.float32)
    w_out = params["w_out"].astype(jnp.float32) * bn_scale[:, None]     # (C, 4*hidden)
    b_out = (params["b_out"].astype(jnp.float32) * bn_scale + bn_shift).reshape(C, 1)

    # ---- reshape params so in-kernel broadcasts are (rows, 1) columns ----
    w_proj = params["w_proj"].astype(jnp.float32)                       # (hidden, C)
    b_proj = params["b_proj"].astype(jnp.float32).reshape(hidden, 1)
    # depthwise weights: (nd, hidden*9) row-major over (c, tap) -> (hidden, nd*9)
    w_dw = jnp.transpose(params["w_dw"].astype(jnp.float32).reshape(nd, hidden, 9),
                         (1, 0, 2)).reshape(hidden, nd * 9)
    b_dw = jnp.transpose(params["b_dw"].astype(jnp.float32))            # (hidden, nd)

    # ---- lane-dense layout: channel-major, (batch * spatial) on lanes ----
    x_t = jnp.transpose(x, (1, 0, 2, 3)).reshape(C, B * HW)

    # per-lane (y, x) coordinates, periodic every H*W lanes
    yy, xx = jnp.meshgrid(jnp.arange(H, dtype=jnp.int32),
                          jnp.arange(W, dtype=jnp.int32), indexing="ij")
    coords = jnp.tile(jnp.stack([yy.reshape(-1), xx.reshape(-1)]), (1, B))  # (2, B*HW)

    Bt = _pick_batch_block(B, HW)
    lanes = Bt * HW

    kern = functools.partial(squeeze_conv_kernel, H=H, W=W, hidden=hidden,
                             dilations=tuple(dilations))
    param_arrays = [w_proj, b_proj, w_dw, b_dw, w_out, b_out]

    out_t = pl.pallas_call(
        kern,
        out_shape=jax.ShapeDtypeStruct((C, B * HW), x.dtype),
        grid_spec=pltpu.PrefetchScalarGridSpec(
            num_scalar_prefetch=0,
            grid=(B // Bt,),
            in_specs=[pl.BlockSpec((C, lanes), lambda i: (0, i)),
                      pl.BlockSpec((2, lanes), lambda i: (0, i))]
                     + [_const_spec(a) for a in param_arrays],
            out_specs=pl.BlockSpec((C, lanes), lambda i: (0, i)),
        ),
        compiler_params=pltpu.CompilerParams(
            dimension_semantics=("parallel",)),
    )(x_t, coords, *param_arrays)

    return jnp.transpose(out_t.reshape(C, B, H, W), (1, 0, 2, 3))


# ---------------- pure-JAX reference (for correctness check) ----------------
def reference(x, p, dilations=DILATIONS):
    prec = lax.Precision.HIGHEST

    def conv1x1(inp, w, b):
        y = lax.conv_general_dilated(inp, w[:, :, None, None], (1, 1), 'VALID',
                                     dimension_numbers=('NCHW', 'OIHW', 'NCHW'),
                                     precision=prec)
        return y + b[None, :, None, None]

    hidden = p["w_proj"].shape[0]
    proj = conv1x1(x, p["w_proj"], p["b_proj"])
    branches = []
    for di, d in enumerate(dilations):
        w = p["w_dw"][di].reshape(hidden, 1, 3, 3)
        y = lax.conv_general_dilated(proj, w, (1, 1), 'SAME',
                                     rhs_dilation=(d, d),
                                     dimension_numbers=('NCHW', 'OIHW', 'NCHW'),
                                     feature_group_count=hidden,
                                     precision=prec)
        y = y + p["b_dw"][di][None, :, None, None]
        branches.append(jnp.where(y > 0, y, NEG_SLOPE * y))
    cat = jnp.concatenate(branches, axis=1)
    out = conv1x1(cat, p["w_out"], p["b_out"])
    out = out * p["bn_scale"][None, :, None, None] + p["bn_shift"][None, :, None, None]
    out = jnp.where(out > 0, out, NEG_SLOPE * out)
    return out + x


if __name__ == "__main__":
    B, C, H, W = 2, 8, 16, 16
    ratio = 2
    hidden = C // ratio

    key = jax.random.PRNGKey(0)
    ks = jax.random.split(key, 9)

    gamma = 1.0 + 0.1 * jax.random.normal(ks[6], (C,), jnp.float32)
    beta = 0.1 * jax.random.normal(ks[7], (C,), jnp.float32)
    running_mean = jnp.zeros((C,), jnp.float32)
    running_var = jnp.ones((C,), jnp.float32)
    eps = 1e-5
    bn_scale = gamma / jnp.sqrt(running_var + eps)
    bn_shift = beta - running_mean * bn_scale

    params = {
        "w_proj": 0.3 * jax.random.normal(ks[0], (hidden, C), jnp.float32),
        "b_proj": 0.1 * jax.random.normal(ks[1], (hidden,), jnp.float32),
        # depthwise weights: (num_dilations, hidden*3*3), row-major over (c, ky, kx)
        "w_dw": 0.3 * jax.random.normal(ks[2], (len(DILATIONS), hidden * 9), jnp.float32),
        "b_dw": 0.1 * jax.random.normal(ks[3], (len(DILATIONS), hidden), jnp.float32),
        "w_out": 0.3 * jax.random.normal(ks[4], (C, 4 * hidden), jnp.float32),
        "b_out": 0.1 * jax.random.normal(ks[5], (C,), jnp.float32),
        "bn_scale": bn_scale,
        "bn_shift": bn_shift,
    }

    x = jax.random.normal(ks[8], (B, C, H, W), jnp.float32)

    out = jax.block_until_ready(squeeze_convolution(x, params))
    ref = jax.block_until_ready(reference(x, params))

    assert out.shape == (B, C, H, W) and out.dtype == jnp.float32
    err = float(jnp.max(jnp.abs(out - ref)))
    # Loose-ish tolerance: the in-kernel f32 matmuls may run with MXU bf16
    # passes at default precision; structural bugs would show errors >> 1e-2.
    assert jnp.allclose(out, ref, rtol=1e-2, atol=1e-2), f"max abs err {err}"

    print("KERNEL_OK")
</pallas_src>

<mosaic_0001>
module attributes {stable_mosaic.version = 11 : i64} {
  func.func @squeeze_conv_kernel(%arg0: i32, %arg1: memref<8x256xf32, #tpu.memory_space<vmem>>, %arg2: memref<2x256xi32, #tpu.memory_space<vmem>>, %arg3: memref<4x8xf32, #tpu.memory_space<vmem>>, %arg4: memref<4x1xf32, #tpu.memory_space<vmem>>, %arg5: memref<4x36xf32, #tpu.memory_space<vmem>>, %arg6: memref<4x4xf32, #tpu.memory_space<vmem>>, %arg7: memref<8x16xf32, #tpu.memory_space<vmem>>, %arg8: memref<8x1xf32, #tpu.memory_space<vmem>>, %arg9: memref<8x256xf32, #tpu.memory_space<vmem>>) attributes {dimension_semantics = [#tpu.dimension_semantics<parallel>], iteration_bounds = array<i64: 2>, scalar_prefetch = 0 : i64, scratch_operands = 0 : i64, tpu.core_type = #tpu.core_type<tc>, window_params = [{transform_indices = @transform_0, window_bounds = array<i64: 8, 256>}, {transform_indices = @transform_1, window_bounds = array<i64: 2, 256>}, {pipeline_mode = #tpu.pipeline_mode<synchronous>, transform_indices = @transform_2, window_bounds = array<i64: 4, 8>}, {pipeline_mode = #tpu.pipeline_mode<synchronous>, transform_indices = @transform_3, window_bounds = array<i64: 4, 1>}, {pipeline_mode = #tpu.pipeline_mode<synchronous>, transform_indices = @transform_4, window_bounds = array<i64: 4, 36>}, {pipeline_mode = #tpu.pipeline_mode<synchronous>, transform_indices = @transform_5, window_bounds = array<i64: 4, 4>}, {pipeline_mode = #tpu.pipeline_mode<synchronous>, transform_indices = @transform_6, window_bounds = array<i64: 8, 16>}, {pipeline_mode = #tpu.pipeline_mode<synchronous>, transform_indices = @transform_7, window_bounds = array<i64: 8, 1>}, {transform_indices = @transform_8, window_bounds = array<i64: 8, 256>}]} {
    %c0 = arith.constant 0 : index
    %c0_0 = arith.constant 0 : index
    %0 = vector.load %arg1[%c0, %c0_0] : memref<8x256xf32, #tpu.memory_space<vmem>>, vector<8x256xf32>
    %c0_1 = arith.constant 0 : index
    %c0_2 = arith.constant 0 : index
    %1 = vector.load %arg3[%c0_1, %c0_2] : memref<4x8xf32, #tpu.memory_space<vmem>>, vector<4x8xf32>
    %cst = arith.constant dense<0.000000e+00> : vector<4x256xf32>
    %2 = tpu.matmul %1, %0, %cst {dimension_numbers = #tpu.dot_dimension_numbers<[1], [0], [0], [1], [0, 0, 1, 1], [], []>} : vector<4x8xf32>, vector<8x256xf32>, vector<4x256xf32> -> vector<4x256xf32>
    %c0_3 = arith.constant 0 : index
    %c0_4 = arith.constant 0 : index
    %3 = vector.load %arg4[%c0_3, %c0_4] : memref<4x1xf32, #tpu.memory_space<vmem>>, vector<4x1xf32>
    %4 = vector.broadcast %3 : vector<4x1xf32> to vector<4x256xf32>
    %5 = arith.addf %2, %4 : vector<4x256xf32>
    %c0_5 = arith.constant 0 : index
    %c0_6 = arith.constant 0 : index
    %6 = vector.load %arg2[%c0_5, %c0_6] : memref<2x256xi32, #tpu.memory_space<vmem>>, vector<1x256xi32>
    %c1 = arith.constant 1 : index
    %c0_7 = arith.constant 0 : index
    %7 = vector.load %arg2[%c1, %c0_7] : memref<2x256xi32, #tpu.memory_space<vmem>>, vector<1x256xi32>
    %cst_8 = arith.constant 0.000000e+00 : f32
    %8 = vector.broadcast %cst_8 : f32 to vector<8x256xf32>
    %c1_i32 = arith.constant 1 : i32
    %9 = vector.broadcast %c1_i32 : i32 to vector<1x256xi32>
    %10 = arith.cmpi sge, %7, %9 : vector<1x256xi32>
    %c15_i32 = arith.constant 15 : i32
    %11 = vector.broadcast %c15_i32 : i32 to vector<1x256xi32>
    %12 = arith.cmpi slt, %7, %11 : vector<1x256xi32>
    %c1_i32_9 = arith.constant 1 : i32
    %13 = vector.broadcast %c1_i32_9 : i32 to vector<1x256xi32>
    %14 = arith.cmpi sge, %6, %13 : vector<1x256xi32>
    %c15_i32_10 = arith.constant 15 : i32
    %15 = vector.broadcast %c15_i32_10 : i32 to vector<1x256xi32>
    %16 = arith.cmpi slt, %6, %15 : vector<1x256xi32>
    %cst_11 = arith.constant 0.000000e+00 : f32
    %17 = vector.broadcast %cst_11 : f32 to vector<4x256xf32>
    %c0_12 = arith.constant 0 : index
    %c0_13 = arith.constant 0 : index
    %18 = vector.load %arg5[%c0_12, %c0_13] : memref<4x36xf32, #tpu.memory_space<vmem>>, vector<4x1xf32>
    %c17_i32 = arith.constant 17 : i32
    %19 = tpu.dynamic_rotate %5 by %c17_i32 dim 1 : vector<4x256xf32>, i32 -> vector<4x256xf32>
    %20 = arith.andi %14, %10 : vector<1x256xi1>
    %cst_14 = arith.constant 0.000000e+00 : f32
    %21 = vector.shape_cast %20 : vector<1x256xi1> to vector<1x256xi1>
    %22 = vector.broadcast %21 : vector<1x256xi1> to vector<4x256xi1>
    %23 = vector.broadcast %cst_14 : f32 to vector<4x256xf32>
    %24 = arith.select %22, %19, %23 : vector<4x256xi1>, vector<4x256xf32>
    %25 = vector.broadcast %18 : vector<4x1xf32> to vector<4x256xf32>
    %26 = arith.mulf %25, %24 : vector<4x256xf32>
    %27 = arith.addf %17, %26 : vector<4x256xf32>
    %c0_15 = arith.constant 0 : index
    %c1_16 = arith.constant 1 : index
    %28 = vector.load %arg5[%c0_15, %c1_16] : memref<4x36xf32, #tpu.memory_space<vmem>>, vector<4x1xf32>
    %c16_i32 = arith.constant 16 : i32
    %29 = tpu.dynamic_rotate %5 by %c16_i32 dim 1 : vector<4x256xf32>, i32 -> vector<4x256xf32>
    %cst_17 = arith.constant 0.000000e+00 : f32
    %30 = vector.shape_cast %14 : vector<1x256xi1> to vector<1x256xi1>
    %31 = vector.broadcast %30 : vector<1x256xi1> to vector<4x256xi1>
    %32 = vector.broadcast %cst_17 : f32 to vector<4x256xf32>
    %33 = arith.select %31, %29, %32 : vector<4x256xi1>, vector<4x256xf32>
    %34 = vector.broadcast %28 : vector<4x1xf32> to vector<4x256xf32>
    %35 = arith.mulf %34, %33 : vector<4x256xf32>
    %36 = arith.addf %27, %35 : vector<4x256xf32>
    %c0_18 = arith.constant 0 : index
    %c2 = arith.constant 2 : index
    %37 = vector.load %arg5[%c0_18, %c2] : memref<4x36xf32, #tpu.memory_space<vmem>>, vector<4x1xf32>
    %c15_i32_19 = arith.constant 15 : i32
    %38 = tpu.dynamic_rotate %5 by %c15_i32_19 dim 1 : vector<4x256xf32>, i32 -> vector<4x256xf32>
    %39 = arith.andi %14, %12 : vector<1x256xi1>
    %cst_20 = arith.constant 0.000000e+00 : f32
    %40 = vector.shape_cast %39 : vector<1x256xi1> to vector<1x256xi1>
    %41 = vector.broadcast %40 : vector<1x256xi1> to vector<4x256xi1>
    %42 = vector.broadcast %cst_20 : f32 to vector<4x256xf32>
    %43 = arith.select %41, %38, %42 : vector<4x256xi1>, vector<4x256xf32>
    %44 = vector.broadcast %37 : vector<4x1xf32> to vector<4x256xf32>
    %45 = arith.mulf %44, %43 : vector<4x256xf32>
    %46 = arith.addf %36, %45 : vector<4x256xf32>
    %c0_21 = arith.constant 0 : index
    %c3 = arith.constant 3 : index
    %47 = vector.load %arg5[%c0_21, %c3] : memref<4x36xf32, #tpu.memory_space<vmem>>, vector<4x1xf32>
    %c1_i32_22 = arith.constant 1 : i32
    %48 = tpu.dynamic_rotate %5 by %c1_i32_22 dim 1 : vector<4x256xf32>, i32 -> vector<4x256xf32>
    %cst_23 = arith.constant 0.000000e+00 : f32
    %49 = vector.shape_cast %10 : vector<1x256xi1> to vector<1x256xi1>
    %50 = vector.broadcast %49 : vector<1x256xi1> to vector<4x256xi1>
    %51 = vector.broadcast %cst_23 : f32 to vector<4x256xf32>
    %52 = arith.select %50, %48, %51 : vector<4x256xi1>, vector<4x256xf32>
    %53 = vector.broadcast %47 : vector<4x1xf32> to vector<4x256xf32>
    %54 = arith.mulf %53, %52 : vector<4x256xf32>
    %55 = arith.addf %46, %54 : vector<4x256xf32>
    %c0_24 = arith.constant 0 : index
    %c4 = arith.constant 4 : index
    %56 = vector.load %arg5[%c0_24, %c4] : memref<4x36xf32, #tpu.memory_space<vmem>>, vector<4x1xf32>
    %57 = vector.broadcast %56 : vector<4x1xf32> to vector<4x256xf32>
    %58 = arith.mulf %57, %5 : vector<4x256xf32>
    %59 = arith.addf %55, %58 : vector<4x256xf32>
    %c0_25 = arith.constant 0 : index
    %c5 = arith.constant 5 : index
    %60 = vector.load %arg5[%c0_25, %c5] : memref<4x36xf32, #tpu.memory_space<vmem>>, vector<4x1xf32>
    %c255_i32 = arith.constant 255 : i32
    %61 = tpu.dynamic_rotate %5 by %c255_i32 dim 1 : vector<4x256xf32>, i32 -> vector<4x256xf32>
    %cst_26 = arith.constant 0.000000e+00 : f32
    %62 = vector.shape_cast %12 : vector<1x256xi1> to vector<1x256xi1>
    %63 = vector.broadcast %62 : vector<1x256xi1> to vector<4x256xi1>
    %64 = vector.broadcast %cst_26 : f32 to vector<4x256xf32>
    %65 = arith.select %63, %61, %64 : vector<4x256xi1>, vector<4x256xf32>
    %66 = vector.broadcast %60 : vector<4x1xf32> to vector<4x256xf32>
    %67 = arith.mulf %66, %65 : vector<4x256xf32>
    %68 = arith.addf %59, %67 : vector<4x256xf32>
    %c0_27 = arith.constant 0 : index
    %c6 = arith.constant 6 : index
    %69 = vector.load %arg5[%c0_27, %c6] : memref<4x36xf32, #tpu.memory_space<vmem>>, vector<4x1xf32>
    %c241_i32 = arith.constant 241 : i32
    %70 = tpu.dynamic_rotate %5 by %c241_i32 dim 1 : vector<4x256xf32>, i32 -> vector<4x256xf32>
    %71 = arith.andi %16, %10 : vector<1x256xi1>
    %cst_28 = arith.constant 0.000000e+00 : f32
    %72 = vector.shape_cast %71 : vector<1x256xi1> to vector<1x256xi1>
    %73 = vector.broadcast %72 : vector<1x256xi1> to vector<4x256xi1>
    %74 = vector.broadcast %cst_28 : f32 to vector<4x256xf32>
    %75 = arith.select %73, %70, %74 : vector<4x256xi1>, vector<4x256xf32>
    %76 = vector.broadcast %69 : vector<4x1xf32> to vector<4x256xf32>
    %77 = arith.mulf %76, %75 : vector<4x256xf32>
    %78 = arith.addf %68, %77 : vector<4x256xf32>
    %c0_29 = arith.constant 0 : index
    %c7 = arith.constant 7 : index
    %79 = vector.load %arg5[%c0_29, %c7] : memref<4x36xf32, #tpu.memory_space<vmem>>, vector<4x1xf32>
    %c240_i32 = arith.constant 240 : i32
    %80 = tpu.dynamic_rotate %5 by %c240_i32 dim 1 : vector<4x256xf32>, i32 -> vector<4x256xf32>
    %cst_30 = arith.constant 0.000000e+00 : f32
    %81 = vector.shape_cast %16 : vector<1x256xi1> to vector<1x256xi1>
    %82 = vector.broadcast %81 : vector<1x256xi1> to vector<4x256xi1>
    %83 = vector.broadcast %cst_30 : f32 to vector<4x256xf32>
    %84 = arith.select %82, %80, %83 : vector<4x256xi1>, vector<4x256xf32>
    %85 = vector.broadcast %79 : vector<4x1xf32> to vector<4x256xf32>
    %86 = arith.mulf %85, %84 : vector<4x256xf32>
    %87 = arith.addf %78, %86 : vector<4x256xf32>
    %c0_31 = arith.constant 0 : index
    %c8 = arith.constant 8 : index
    %88 = vector.load %arg5[%c0_31, %c8] : memref<4x36xf32, #tpu.memory_space<vmem>>, vector<4x1xf32>
    %c239_i32 = arith.constant 239 : i32
    %89 = tpu.dynamic_rotate %5 by %c239_i32 dim 1 : vector<4x256xf32>, i32 -> vector<4x256xf32>
    %90 = arith.andi %16, %12 : vector<1x256xi1>
    %cst_32 = arith.constant 0.000000e+00 : f32
    %91 = vector.shape_cast %90 : vector<1x256xi1> to vector<1x256xi1>
    %92 = vector.broadcast %91 : vector<1x256xi1> to vector<4x256xi1>
    %93 = vector.broadcast %cst_32 : f32 to vector<4x256xf32>
    %94 = arith.select %92, %89, %93 : vector<4x256xi1>, vector<4x256xf32>
    %95 = vector.broadcast %88 : vector<4x1xf32> to vector<4x256xf32>
    %96 = arith.mulf %95, %94 : vector<4x256xf32>
    %97 = arith.addf %87, %96 : vector<4x256xf32>
    %c0_33 = arith.constant 0 : index
    %c0_34 = arith.constant 0 : index
    %98 = vector.load %arg6[%c0_33, %c0_34] : memref<4x4xf32, #tpu.memory_space<vmem>>, vector<4x1xf32>
    %99 = vector.broadcast %98 : vector<4x1xf32> to vector<4x256xf32>
    %100 = arith.addf %97, %99 : vector<4x256xf32>
    %cst_35 = arith.constant 0.000000e+00 : f32
    %101 = vector.broadcast %cst_35 : f32 to vector<4x256xf32>
    %102 = arith.cmpf ogt, %100, %101 : vector<4x256xf32>
    %cst_36 = arith.constant 0.00999999977 : f32
    %103 = vector.broadcast %cst_36 : f32 to vector<4x256xf32>
    %104 = arith.mulf %103, %100 : vector<4x256xf32>
    %105 = arith.select %102, %100, %104 : vector<4x256xi1>, vector<4x256xf32>
    %c0_37 = arith.constant 0 : index
    %c0_38 = arith.constant 0 : index
    %106 = vector.load %arg7[%c0_37, %c0_38] : memref<8x16xf32, #tpu.memory_space<vmem>>, vector<8x4xf32>
    %cst_39 = arith.constant dense<0.000000e+00> : vector<8x256xf32>
    %107 = tpu.matmul %106, %105, %cst_39 {dimension_numbers = #tpu.dot_dimension_numbers<[1], [0], [0], [1], [0, 0, 1, 1], [], []>} : vector<8x4xf32>, vector<4x256xf32>, vector<8x256xf32> -> vector<8x256xf32>
    %108 = arith.addf %8, %107 : vector<8x256xf32>
    %c2_i32 = arith.constant 2 : i32
    %109 = vector.broadcast %c2_i32 : i32 to vector<1x256xi32>
    %110 = arith.cmpi sge, %7, %109 : vector<1x256xi32>
    %c14_i32 = arith.constant 14 : i32
    %111 = vector.broadcast %c14_i32 : i32 to vector<1x256xi32>
    %112 = arith.cmpi slt, %7, %111 : vector<1x256xi32>
    %c2_i32_40 = arith.constant 2 : i32
    %113 = vector.broadcast %c2_i32_40 : i32 to vector<1x256xi32>
    %114 = arith.cmpi sge, %6, %113 : vector<1x256xi32>
    %c14_i32_41 = arith.constant 14 : i32
    %115 = vector.broadcast %c14_i32_41 : i32 to vector<1x256xi32>
    %116 = arith.cmpi slt, %6, %115 : vector<1x256xi32>
    %cst_42 = arith.constant 0.000000e+00 : f32
    %117 = vector.broadcast %cst_42 : f32 to vector<4x256xf32>
    %c0_43 = arith.constant 0 : index
    %c9 = arith.constant 9 : index
    %118 = vector.load %arg5[%c0_43, %c9] : memref<4x36xf32, #tpu.memory_space<vmem>>, vector<4x1xf32>
    %c34_i32 = arith.constant 34 : i32
    %119 = tpu.dynamic_rotate %5 by %c34_i32 dim 1 : vector<4x256xf32>, i32 -> vector<4x256xf32>
    %120 = arith.andi %114, %110 : vector<1x256xi1>
    %cst_44 = arith.constant 0.000000e+00 : f32
    %121 = vector.shape_cast %120 : vector<1x256xi1> to vector<1x256xi1>
    %122 = vector.broadcast %121 : vector<1x256xi1> to vector<4x256xi1>
    %123 = vector.broadcast %cst_44 : f32 to vector<4x256xf32>
    %124 = arith.select %122, %119, %123 : vector<4x256xi1>, vector<4x256xf32>
    %125 = vector.broadcast %118 : vector<4x1xf32> to vector<4x256xf32>
    %126 = arith.mulf %125, %124 : vector<4x256xf32>
    %127 = arith.addf %117, %126 : vector<4x256xf32>
    %c0_45 = arith.constant 0 : index
    %c10 = arith.constant 10 : index
    %128 = vector.load %arg5[%c0_45, %c10] : memref<4x36xf32, #tpu.memory_space<vmem>>, vector<4x1xf32>
    %c32_i32 = arith.constant 32 : i32
    %129 = tpu.dynamic_rotate %5 by %c32_i32 dim 1 : vector<4x256xf32>, i32 -> vector<4x256xf32>
    %cst_46 = arith.constant 0.000000e+00 : f32
    %130 = vector.shape_cast %114 : vector<1x256xi1> to vector<1x256xi1>
    %131 = vector.broadcast %130 : vector<1x256xi1> to vector<4x256xi1>
    %132 = vector.broadcast %cst_46 : f32 to vector<4x256xf32>
    %133 = arith.select %131, %129, %132 : vector<4x256xi1>, vector<4x256xf32>
    %134 = vector.broadcast %128 : vector<4x1xf32> to vector<4x256xf32>
    %135 = arith.mulf %134, %133 : vector<4x256xf32>
    %136 = arith.addf %127, %135 : vector<4x256xf32>
    %c0_47 = arith.constant 0 : index
    %c11 = arith.constant 11 : index
    %137 = vector.load %arg5[%c0_47, %c11] : memref<4x36xf32, #tpu.memory_space<vmem>>, vector<4x1xf32>
    %c30_i32 = arith.constant 30 : i32
    %138 = tpu.dynamic_rotate %5 by %c30_i32 dim 1 : vector<4x256xf32>, i32 -> vector<4x256xf32>
    %139 = arith.andi %114, %112 : vector<1x256xi1>
    %cst_48 = arith.constant 0.000000e+00 : f32
    %140 = vector.shape_cast %139 : vector<1x256xi1> to vector<1x256xi1>
    %141 = vector.broadcast %140 : vector<1x256xi1> to vector<4x256xi1>
    %142 = vector.broadcast %cst_48 : f32 to vector<4x256xf32>
    %143 = arith.select %141, %138, %142 : vector<4x256xi1>, vector<4x256xf32>
    %144 = vector.broadcast %137 : vector<4x1xf32> to vector<4x256xf32>
    %145 = arith.mulf %144, %143 : vector<4x256xf32>
    %146 = arith.addf %136, %145 : vector<4x256xf32>
    %c0_49 = arith.constant 0 : index
    %c12 = arith.constant 12 : index
    %147 = vector.load %arg5[%c0_49, %c12] : memref<4x36xf32, #tpu.memory_space<vmem>>, vector<4x1xf32>
    %c2_i32_50 = arith.constant 2 : i32
    %148 = tpu.dynamic_rotate %5 by %c2_i32_50 dim 1 : vector<4x256xf32>, i32 -> vector<4x256xf32>
    %cst_51 = arith.constant 0.000000e+00 : f32
    %149 = vector.shape_cast %110 : vector<1x256xi1> to vector<1x256xi1>
    %150 = vector.broadcast %149 : vector<1x256xi1> to vector<4x256xi1>
    %151 = vector.broadcast %cst_51 : f32 to vector<4x256xf32>
    %152 = arith.select %150, %148, %151 : vector<4x256xi1>, vector<4x256xf32>
    %153 = vector.broadcast %147 : vector<4x1xf32> to vector<4x256xf32>
    %154 = arith.mulf %153, %152 : vector<4x256xf32>
    %155 = arith.addf %146, %154 : vector<4x256xf32>
    %c0_52 = arith.constant 0 : index
    %c13 = arith.constant 13 : index
    %156 = vector.load %arg5[%c0_52, %c13] : memref<4x36xf32, #tpu.memory_space<vmem>>, vector<4x1xf32>
    %157 = vector.broadcast %156 : vector<4x1xf32> to vector<4x256xf32>
    %158 = arith.mulf %157, %5 : vector<4x256xf32>
    %159 = arith.addf %155, %158 : vector<4x256xf32>
    %c0_53 = arith.constant 0 : index
    %c14 = arith.constant 14 : index
    %160 = vector.load %arg5[%c0_53, %c14] : memref<4x36xf32, #tpu.memory_space<vmem>>, vector<4x1xf32>
    %c254_i32 = arith.constant 254 : i32
    %161 = tpu.dynamic_rotate %5 by %c254_i32 dim 1 : vector<4x256xf32>, i32 -> vector<4x256xf32>
    %cst_54 = arith.constant 0.000000e+00 : f32
    %162 = vector.shape_cast %112 : vector<1x256xi1> to vector<1x256xi1>
    %163 = vector.broadcast %162 : vector<1x256xi1> to vector<4x256xi1>
    %164 = vector.broadcast %cst_54 : f32 to vector<4x256xf32>
    %165 = arith.select %163, %161, %164 : vector<4x256xi1>, vector<4x256xf32>
    %166 = vector.broadcast %160 : vector<4x1xf32> to vector<4x256xf32>
    %167 = arith.mulf %166, %165 : vector<4x256xf32>
    %168 = arith.addf %159, %167 : vector<4x256xf32>
    %c0_55 = arith.constant 0 : index
    %c15 = arith.constant 15 : index
    %169 = vector.load %arg5[%c0_55, %c15] : memref<4x36xf32, #tpu.memory_space<vmem>>, vector<4x1xf32>
    %c226_i32 = arith.constant 226 : i32
    %170 = tpu.dynamic_rotate %5 by %c226_i32 dim 1 : vector<4x256xf32>, i32 -> vector<4x256xf32>
    %171 = arith.andi %116, %110 : vector<1x256xi1>
    %cst_56 = arith.constant 0.000000e+00 : f32
    %172 = vector.shape_cast %171 : vector<1x256xi1> to vector<1x256xi1>
    %173 = vector.broadcast %172 : vector<1x256xi1> to vector<4x256xi1>
    %174 = vector.broadcast %cst_56 : f32 to vector<4x256xf32>
    %175 = arith.select %173, %170, %174 : vector<4x256xi1>, vector<4x256xf32>
    %176 = vector.broadcast %169 : vector<4x1xf32> to vector<4x256xf32>
    %177 = arith.mulf %176, %175 : vector<4x256xf32>
    %178 = arith.addf %168, %177 : vector<4x256xf32>
    %c0_57 = arith.constant 0 : index
    %c16 = arith.constant 16 : index
    %179 = vector.load %arg5[%c0_57, %c16] : memref<4x36xf32, #tpu.memory_space<vmem>>, vector<4x1xf32>
    %c224_i32 = arith.constant 224 : i32
    %180 = tpu.dynamic_rotate %5 by %c224_i32 dim 1 : vector<4x256xf32>, i32 -> vector<4x256xf32>
    %cst_58 = arith.constant 0.000000e+00 : f32
    %181 = vector.shape_cast %116 : vector<1x256xi1> to vector<1x256xi1>
    %182 = vector.broadcast %181 : vector<1x256xi1> to vector<4x256xi1>
    %183 = vector.broadcast %cst_58 : f32 to vector<4x256xf32>
    %184 = arith.select %182, %180, %183 : vector<4x256xi1>, vector<4x256xf32>
    %185 = vector.broadcast %179 : vector<4x1xf32> to vector<4x256xf32>
    %186 = arith.mulf %185, %184 : vector<4x256xf32>
    %187 = arith.addf %178, %186 : vector<4x256xf32>
    %c0_59 = arith.constant 0 : index
    %c17 = arith.constant 17 : index
    %188 = vector.load %arg5[%c0_59, %c17] : memref<4x36xf32, #tpu.memory_space<vmem>>, vector<4x1xf32>
    %c222_i32 = arith.constant 222 : i32
    %189 = tpu.dynamic_rotate %5 by %c222_i32 dim 1 : vector<4x256xf32>, i32 -> vector<4x256xf32>
    %190 = arith.andi %116, %112 : vector<1x256xi1>
    %cst_60 = arith.constant 0.000000e+00 : f32
    %191 = vector.shape_cast %190 : vector<1x256xi1> to vector<1x256xi1>
    %192 = vector.broadcast %191 : vector<1x256xi1> to vector<4x256xi1>
    %193 = vector.broadcast %cst_60 : f32 to vector<4x256xf32>
    %194 = arith.select %192, %189, %193 : vector<4x256xi1>, vector<4x256xf32>
    %195 = vector.broadcast %188 : vector<4x1xf32> to vector<4x256xf32>
    %196 = arith.mulf %195, %194 : vector<4x256xf32>
    %197 = arith.addf %187, %196 : vector<4x256xf32>
    %c0_61 = arith.constant 0 : index
    %c1_62 = arith.constant 1 : index
    %198 = vector.load %arg6[%c0_61, %c1_62] : memref<4x4xf32, #tpu.memory_space<vmem>>, vector<4x1xf32>
    %199 = vector.broadcast %198 : vector<4x1xf32> to vector<4x256xf32>
    %200 = arith.addf %197, %199 : vector<4x256xf32>
    %cst_63 = arith.constant 0.000000e+00 : f32
    %201 = vector.broadcast %cst_63 : f32 to vector<4x256xf32>
    %202 = arith.cmpf ogt, %200, %201 : vector<4x256xf32>
    %cst_64 = arith.constant 0.00999999977 : f32
    %203 = vector.broadcast %cst_64 : f32 to vector<4x256xf32>
    %204 = arith.mulf %203, %200 : vector<4x256xf32>
    %205 = arith.select %202, %200, %204 : vector<4x256xi1>, vector<4x256xf32>
    %c0_65 = arith.constant 0 : index
    %c4_66 = arith.constant 4 : index
    %206 = vector.load %arg7[%c0_65, %c4_66] : memref<8x16xf32, #tpu.memory_space<vmem>>, vector<8x4xf32>
    %cst_67 = arith.constant dense<0.000000e+00> : vector<8x256xf32>
    %207 = tpu.matmul %206, %205, %cst_67 {dimension_numbers = #tpu.dot_dimension_numbers<[1], [0], [0], [1], [0, 0, 1, 1], [], []>} : vector<8x4xf32>, vector<4x256xf32>, vector<8x256xf32> -> vector<8x256xf32>
    %208 = arith.addf %108, %207 : vector<8x256xf32>
    %c4_i32 = arith.constant 4 : i32
    %209 = vector.broadcast %c4_i32 : i32 to vector<1x256xi32>
    %210 = arith.cmpi sge, %7, %209 : vector<1x256xi32>
    %c12_i32 = arith.constant 12 : i32
    %211 = vector.broadcast %c12_i32 : i32 to vector<1x256xi32>
    %212 = arith.cmpi slt, %7, %211 : vector<1x256xi32>
    %c4_i32_68 = arith.constant 4 : i32
    %213 = vector.broadcast %c4_i32_68 : i32 to vector<1x256xi32>
    %214 = arith.cmpi sge, %6, %213 : vector<1x256xi32>
    %c12_i32_69 = arith.constant 12 : i32
    %215 = vector.broadcast %c12_i32_69 : i32 to vector<1x256xi32>
    %216 = arith.cmpi slt, %6, %215 : vector<1x256xi32>
    %cst_70 = arith.constant 0.000000e+00 : f32
    %217 = vector.broadcast %cst_70 : f32 to vector<4x256xf32>
    %c0_71 = arith.constant 0 : index
    %c18 = arith.constant 18 : index
    %218 = vector.load %arg5[%c0_71, %c18] : memref<4x36xf32, #tpu.memory_space<vmem>>, vector<4x1xf32>
    %c68_i32 = arith.constant 68 : i32
    %219 = tpu.dynamic_rotate %5 by %c68_i32 dim 1 : vector<4x256xf32>, i32 -> vector<4x256xf32>
    %220 = arith.andi %214, %210 : vector<1x256xi1>
    %cst_72 = arith.constant 0.000000e+00 : f32
    %221 = vector.shape_cast %220 : vector<1x256xi1> to vector<1x256xi1>
    %222 = vector.broadcast %221 : vector<1x256xi1> to vector<4x256xi1>
    %223 = vector.broadcast %cst_72 : f32 to vector<4x256xf32>
    %224 = arith.select %222, %219, %223 : vector<4x256xi1>, vector<4x256xf32>
    %225 = vector.broadcast %218 : vector<4x1xf32> to vector<4x256xf32>
    %226 = arith.mulf %225, %224 : vector<4x256xf32>
    %227 = arith.addf %217, %226 : vector<4x256xf32>
    %c0_73 = arith.constant 0 : index
    %c19 = arith.constant 19 : index
    %228 = vector.load %arg5[%c0_73, %c19] : memref<4x36xf32, #tpu.memory_space<vmem>>, vector<4x1xf32>
    %c64_i32 = arith.constant 64 : i32
    %229 = tpu.dynamic_rotate %5 by %c64_i32 dim 1 : vector<4x256xf32>, i32 -> vector<4x256xf32>
    %cst_74 = arith.constant 0.000000e+00 : f32
    %230 = vector.shape_cast %214 : vector<1x256xi1> to vector<1x256xi1>
    %231 = vector.broadcast %230 : vector<1x256xi1> to vector<4x256xi1>
    %232 = vector.broadcast %cst_74 : f32 to vector<4x256xf32>
    %233 = arith.select %231, %229, %232 : vector<4x256xi1>, vector<4x256xf32>
    %234 = vector.broadcast %228 : vector<4x1xf32> to vector<4x256xf32>
    %235 = arith.mulf %234, %233 : vector<4x256xf32>
    %236 = arith.addf %227, %235 : vector<4x256xf32>
    %c0_75 = arith.constant 0 : index
    %c20 = arith.constant 20 : index
    %237 = vector.load %arg5[%c0_75, %c20] : memref<4x36xf32, #tpu.memory_space<vmem>>, vector<4x1xf32>
    %c60_i32 = arith.constant 60 : i32
    %238 = tpu.dynamic_rotate %5 by %c60_i32 dim 1 : vector<4x256xf32>, i32 -> vector<4x256xf32>
    %239 = arith.andi %214, %212 : vector<1x256xi1>
    %cst_76 = arith.constant 0.000000e+00 : f32
    %240 = vector.shape_cast %239 : vector<1x256xi1> to vector<1x256xi1>
    %241 = vector.broadcast %240 : vector<1x256xi1> to vector<4x256xi1>
    %242 = vector.broadcast %cst_76 : f32 to vector<4x256xf32>
    %243 = arith.select %241, %238, %242 : vector<4x256xi1>, vector<4x256xf32>
    %244 = vector.broadcast %237 : vector<4x1xf32> to vector<4x256xf32>
    %245 = arith.mulf %244, %243 : vector<4x256xf32>
    %246 = arith.addf %236, %245 : vector<4x256xf32>
    %c0_77 = arith.constant 0 : index
    %c21 = arith.constant 21 : index
    %247 = vector.load %arg5[%c0_77, %c21] : memref<4x36xf32, #tpu.memory_space<vmem>>, vector<4x1xf32>
    %c4_i32_78 = arith.constant 4 : i32
    %248 = tpu.dynamic_rotate %5 by %c4_i32_78 dim 1 : vector<4x256xf32>, i32 -> vector<4x256xf32>
    %cst_79 = arith.constant 0.000000e+00 : f32
    %249 = vector.shape_cast %210 : vector<1x256xi1> to vector<1x256xi1>
    %250 = vector.broadcast %249 : vector<1x256xi1> to vector<4x256xi1>
    %251 = vector.broadcast %cst_79 : f32 to vector<4x256xf32>
    %252 = arith.select %250, %248, %251 : vector<4x256xi1>, vector<4x256xf32>
    %253 = vector.broadcast %247 : vector<4x1xf32> to vector<4x256xf32>
    %254 = arith.mulf %253, %252 : vector<4x256xf32>
    %255 = arith.addf %246, %254 : vector<4x256xf32>
    %c0_80 = arith.constant 0 : index
    %c22 = arith.constant 22 : index
    %256 = vector.load %arg5[%c0_80, %c22] : memref<4x36xf32, #tpu.memory_space<vmem>>, vector<4x1xf32>
    %257 = vector.broadcast %256 : vector<4x1xf32> to vector<4x256xf32>
    %258 = arith.mulf %257, %5 : vector<4x256xf32>
    %259 = arith.addf %255, %258 : vector<4x256xf32>
    %c0_81 = arith.constant 0 : index
    %c23 = arith.constant 23 : index
    %260 = vector.load %arg5[%c0_81, %c23] : memref<4x36xf32, #tpu.memory_space<vmem>>, vector<4x1xf32>
    %c252_i32 = arith.constant 252 : i32
    %261 = tpu.dynamic_rotate %5 by %c252_i32 dim 1 : vector<4x256xf32>, i32 -> vector<4x256xf32>
    %cst_82 = arith.constant 0.000000e+00 : f32
    %262 = vector.shape_cast %212 : vector<1x256xi1> to vector<1x256xi1>
    %263 = vector.broadcast %262 : vector<1x256xi1> to vector<4x256xi1>
    %264 = vector.broadcast %cst_82 : f32 to vector<4x256xf32>
    %265 = arith.select %263, %261, %264 : vector<4x256xi1>, vector<4x256xf32>
    %266 = vector.broadcast %260 : vector<4x1xf32> to vector<4x256xf32>
    %267 = arith.mulf %266, %265 : vector<4x256xf32>
    %268 = arith.addf %259, %267 : vector<4x256xf32>
    %c0_83 = arith.constant 0 : index
    %c24 = arith.constant 24 : index
    %269 = vector.load %arg5[%c0_83, %c24] : memref<4x36xf32, #tpu.memory_space<vmem>>, vector<4x1xf32>
    %c196_i32 = arith.constant 196 : i32
    %270 = tpu.dynamic_rotate %5 by %c196_i32 dim 1 : vector<4x256xf32>, i32 -> vector<4x256xf32>
    %271 = arith.andi %216, %210 : vector<1x256xi1>
    %cst_84 = arith.constant 0.000000e+00 : f32
    %272 = vector.shape_cast %271 : vector<1x256xi1> to vector<1x256xi1>
    %273 = vector.broadcast %272 : vector<1x256xi1> to vector<4x256xi1>
    %274 = vector.broadcast %cst_84 : f32 to vector<4x256xf32>
    %275 = arith.select %273, %270, %274 : vector<4x256xi1>, vector<4x256xf32>
    %276 = vector.broadcast %269 : vector<4x1xf32> to vector<4x256xf32>
    %277 = arith.mulf %276, %275 : vector<4x256xf32>
    %278 = arith.addf %268, %277 : vector<4x256xf32>
    %c0_85 = arith.constant 0 : index
    %c25 = arith.constant 25 : index
    %279 = vector.load %arg5[%c0_85, %c25] : memref<4x36xf32, #tpu.memory_space<vmem>>, vector<4x1xf32>
    %c192_i32 = arith.constant 192 : i32
    %280 = tpu.dynamic_rotate %5 by %c192_i32 dim 1 : vector<4x256xf32>, i32 -> vector<4x256xf32>
    %cst_86 = arith.constant 0.000000e+00 : f32
    %281 = vector.shape_cast %216 : vector<1x256xi1> to vector<1x256xi1>
    %282 = vector.broadcast %281 : vector<1x256xi1> to vector<4x256xi1>
    %283 = vector.broadcast %cst_86 : f32 to vector<4x256xf32>
    %284 = arith.select %282, %280, %283 : vector<4x256xi1>, vector<4x256xf32>
    %285 = vector.broadcast %279 : vector<4x1xf32> to vector<4x256xf32>
    %286 = arith.mulf %285, %284 : vector<4x256xf32>
    %287 = arith.addf %278, %286 : vector<4x256xf32>
    %c0_87 = arith.constant 0 : index
    %c26 = arith.constant 26 : index
    %288 = vector.load %arg5[%c0_87, %c26] : memref<4x36xf32, #tpu.memory_space<vmem>>, vector<4x1xf32>
    %c188_i32 = arith.constant 188 : i32
    %289 = tpu.dynamic_rotate %5 by %c188_i32 dim 1 : vector<4x256xf32>, i32 -> vector<4x256xf32>
    %290 = arith.andi %216, %212 : vector<1x256xi1>
    %cst_88 = arith.constant 0.000000e+00 : f32
    %291 = vector.shape_cast %290 : vector<1x256xi1> to vector<1x256xi1>
    %292 = vector.broadcast %291 : vector<1x256xi1> to vector<4x256xi1>
    %293 = vector.broadcast %cst_88 : f32 to vector<4x256xf32>
    %294 = arith.select %292, %289, %293 : vector<4x256xi1>, vector<4x256xf32>
    %295 = vector.broadcast %288 : vector<4x1xf32> to vector<4x256xf32>
    %296 = arith.mulf %295, %294 : vector<4x256xf32>
    %297 = arith.addf %287, %296 : vector<4x256xf32>
    %c0_89 = arith.constant 0 : index
    %c2_90 = arith.constant 2 : index
    %298 = vector.load %arg6[%c0_89, %c2_90] : memref<4x4xf32, #tpu.memory_space<vmem>>, vector<4x1xf32>
    %299 = vector.broadcast %298 : vector<4x1xf32> to vector<4x256xf32>
    %300 = arith.addf %297, %299 : vector<4x256xf32>
    %cst_91 = arith.constant 0.000000e+00 : f32
    %301 = vector.broadcast %cst_91 : f32 to vector<4x256xf32>
    %302 = arith.cmpf ogt, %300, %301 : vector<4x256xf32>
    %cst_92 = arith.constant 0.00999999977 : f32
    %303 = vector.broadcast %cst_92 : f32 to vector<4x256xf32>
    %304 = arith.mulf %303, %300 : vector<4x256xf32>
    %305 = arith.select %302, %300, %304 : vector<4x256xi1>, vector<4x256xf32>
    %c0_93 = arith.constant 0 : index
    %c8_94 = arith.constant 8 : index
    %306 = vector.load %arg7[%c0_93, %c8_94] : memref<8x16xf32, #tpu.memory_space<vmem>>, vector<8x4xf32>
    %cst_95 = arith.constant dense<0.000000e+00> : vector<8x256xf32>
    %307 = tpu.matmul %306, %305, %cst_95 {dimension_numbers = #tpu.dot_dimension_numbers<[1], [0], [0], [1], [0, 0, 1, 1], [], []>} : vector<8x4xf32>, vector<4x256xf32>, vector<8x256xf32> -> vector<8x256xf32>
    %308 = arith.addf %208, %307 : vector<8x256xf32>
    %c8_i32 = arith.constant 8 : i32
    %309 = vector.broadcast %c8_i32 : i32 to vector<1x256xi32>
    %310 = arith.cmpi sge, %7, %309 : vector<1x256xi32>
    %c8_i32_96 = arith.constant 8 : i32
    %311 = vector.broadcast %c8_i32_96 : i32 to vector<1x256xi32>
    %312 = arith.cmpi slt, %7, %311 : vector<1x256xi32>
    %c8_i32_97 = arith.constant 8 : i32
    %313 = vector.broadcast %c8_i32_97 : i32 to vector<1x256xi32>
    %314 = arith.cmpi sge, %6, %313 : vector<1x256xi32>
    %c8_i32_98 = arith.constant 8 : i32
    %315 = vector.broadcast %c8_i32_98 : i32 to vector<1x256xi32>
    %316 = arith.cmpi slt, %6, %315 : vector<1x256xi32>
    %cst_99 = arith.constant 0.000000e+00 : f32
    %317 = vector.broadcast %cst_99 : f32 to vector<4x256xf32>
    %c0_100 = arith.constant 0 : index
    %c27 = arith.constant 27 : index
    %318 = vector.load %arg5[%c0_100, %c27] : memref<4x36xf32, #tpu.memory_space<vmem>>, vector<4x1xf32>
    %c136_i32 = arith.constant 136 : i32
    %319 = tpu.dynamic_rotate %5 by %c136_i32 dim 1 : vector<4x256xf32>, i32 -> vector<4x256xf32>
    %320 = arith.andi %314, %310 : vector<1x256xi1>
    %cst_101 = arith.constant 0.000000e+00 : f32
    %321 = vector.shape_cast %320 : vector<1x256xi1> to vector<1x256xi1>
    %322 = vector.broadcast %321 : vector<1x256xi1> to vector<4x256xi1>
    %323 = vector.broadcast %cst_101 : f32 to vector<4x256xf32>
    %324 = arith.select %322, %319, %323 : vector<4x256xi1>, vector<4x256xf32>
    %325 = vector.broadcast %318 : vector<4x1xf32> to vector<4x256xf32>
    %326 = arith.mulf %325, %324 : vector<4x256xf32>
    %327 = arith.addf %317, %326 : vector<4x256xf32>
    %c0_102 = arith.constant 0 : index
    %c28 = arith.constant 28 : index
    %328 = vector.load %arg5[%c0_102, %c28] : memref<4x36xf32, #tpu.memory_space<vmem>>, vector<4x1xf32>
    %c128_i32 = arith.constant 128 : i32
    %329 = tpu.dynamic_rotate %5 by %c128_i32 dim 1 : vector<4x256xf32>, i32 -> vector<4x256xf32>
    %cst_103 = arith.constant 0.000000e+00 : f32
    %330 = vector.shape_cast %314 : vector<1x256xi1> to vector<1x256xi1>
    %331 = vector.broadcast %330 : vector<1x256xi1> to vector<4x256xi1>
    %332 = vector.broadcast %cst_103 : f32 to vector<4x256xf32>
    %333 = arith.select %331, %329, %332 : vector<4x256xi1>, vector<4x256xf32>
    %334 = vector.broadcast %328 : vector<4x1xf32> to vector<4x256xf32>
    %335 = arith.mulf %334, %333 : vector<4x256xf32>
    %336 = arith.addf %327, %335 : vector<4x256xf32>
    %c0_104 = arith.constant 0 : index
    %c29 = arith.constant 29 : index
    %337 = vector.load %arg5[%c0_104, %c29] : memref<4x36xf32, #tpu.memory_space<vmem>>, vector<4x1xf32>
    %c120_i32 = arith.constant 120 : i32
    %338 = tpu.dynamic_rotate %5 by %c120_i32 dim 1 : vector<4x256xf32>, i32 -> vector<4x256xf32>
    %339 = arith.andi %314, %312 : vector<1x256xi1>
    %cst_105 = arith.constant 0.000000e+00 : f32
    %340 = vector.shape_cast %339 : vector<1x256xi1> to vector<1x256xi1>
    %341 = vector.broadcast %340 : vector<1x256xi1> to vector<4x256xi1>
    %342 = vector.broadcast %cst_105 : f32 to vector<4x256xf32>
    %343 = arith.select %341, %338, %342 : vector<4x256xi1>, vector<4x256xf32>
    %344 = vector.broadcast %337 : vector<4x1xf32> to vector<4x256xf32>
    %345 = arith.mulf %344, %343 : vector<4x256xf32>
    %346 = arith.addf %336, %345 : vector<4x256xf32>
    %c0_106 = arith.constant 0 : index
    %c30 = arith.constant 30 : index
    %347 = vector.load %arg5[%c0_106, %c30] : memref<4x36xf32, #tpu.memory_space<vmem>>, vector<4x1xf32>
    %c8_i32_107 = arith.constant 8 : i32
    %348 = tpu.dynamic_rotate %5 by %c8_i32_107 dim 1 : vector<4x256xf32>, i32 -> vector<4x256xf32>
    %cst_108 = arith.constant 0.000000e+00 : f32
    %349 = vector.shape_cast %310 : vector<1x256xi1> to vector<1x256xi1>
    %350 = vector.broadcast %349 : vector<1x256xi1> to vector<4x256xi1>
    %351 = vector.broadcast %cst_108 : f32 to vector<4x256xf32>
    %352 = arith.select %350, %348, %351 : vector<4x256xi1>, vector<4x256xf32>
    %353 = vector.broadcast %347 : vector<4x1xf32> to vector<4x256xf32>
    %354 = arith.mulf %353, %352 : vector<4x256xf32>
    %355 = arith.addf %346, %354 : vector<4x256xf32>
    %c0_109 = arith.constant 0 : index
    %c31 = arith.constant 31 : index
    %356 = vector.load %arg5[%c0_109, %c31] : memref<4x36xf32, #tpu.memory_space<vmem>>, vector<4x1xf32>
    %357 = vector.broadcast %356 : vector<4x1xf32> to vector<4x256xf32>
    %358 = arith.mulf %357, %5 : vector<4x256xf32>
    %359 = arith.addf %355, %358 : vector<4x256xf32>
    %c0_110 = arith.constant 0 : index
    %c32 = arith.constant 32 : index
    %360 = vector.load %arg5[%c0_110, %c32] : memref<4x36xf32, #tpu.memory_space<vmem>>, vector<4x1xf32>
    %c248_i32 = arith.constant 248 : i32
    %361 = tpu.dynamic_rotate %5 by %c248_i32 dim 1 : vector<4x256xf32>, i32 -> vector<4x256xf32>
    %cst_111 = arith.constant 0.000000e+00 : f32
    %362 = vector.shape_cast %312 : vector<1x256xi1> to vector<1x256xi1>
    %363 = vector.broadcast %362 : vector<1x256xi1> to vector<4x256xi1>
    %364 = vector.broadcast %cst_111 : f32 to vector<4x256xf32>
    %365 = arith.select %363, %361, %364 : vector<4x256xi1>, vector<4x256xf32>
    %366 = vector.broadcast %360 : vector<4x1xf32> to vector<4x256xf32>
    %367 = arith.mulf %366, %365 : vector<4x256xf32>
    %368 = arith.addf %359, %367 : vector<4x256xf32>
    %c0_112 = arith.constant 0 : index
    %c33 = arith.constant 33 : index
    %369 = vector.load %arg5[%c0_112, %c33] : memref<4x36xf32, #tpu.memory_space<vmem>>, vector<4x1xf32>
    %c136_i32_113 = arith.constant 136 : i32
    %370 = tpu.dynamic_rotate %5 by %c136_i32_113 dim 1 : vector<4x256xf32>, i32 -> vector<4x256xf32>
    %371 = arith.andi %316, %310 : vector<1x256xi1>
    %cst_114 = arith.constant 0.000000e+00 : f32
    %372 = vector.shape_cast %371 : vector<1x256xi1> to vector<1x256xi1>
    %373 = vector.broadcast %372 : vector<1x256xi1> to vector<4x256xi1>
    %374 = vector.broadcast %cst_114 : f32 to vector<4x256xf32>
    %375 = arith.select %373, %370, %374 : vector<4x256xi1>, vector<4x256xf32>
    %376 = vector.broadcast %369 : vector<4x1xf32> to vector<4x256xf32>
    %377 = arith.mulf %376, %375 : vector<4x256xf32>
    %378 = arith.addf %368, %377 : vector<4x256xf32>
    %c0_115 = arith.constant 0 : index
    %c34 = arith.constant 34 : index
    %379 = vector.load %arg5[%c0_115, %c34] : memref<4x36xf32, #tpu.memory_space<vmem>>, vector<4x1xf32>
    %c128_i32_116 = arith.constant 128 : i32
    %380 = tpu.dynamic_rotate %5 by %c128_i32_116 dim 1 : vector<4x256xf32>, i32 -> vector<4x256xf32>
    %cst_117 = arith.constant 0.000000e+00 : f32
    %381 = vector.shape_cast %316 : vector<1x256xi1> to vector<1x256xi1>
    %382 = vector.broadcast %381 : vector<1x256xi1> to vector<4x256xi1>
    %383 = vector.broadcast %cst_117 : f32 to vector<4x256xf32>
    %384 = arith.select %382, %380, %383 : vector<4x256xi1>, vector<4x256xf32>
    %385 = vector.broadcast %379 : vector<4x1xf32> to vector<4x256xf32>
    %386 = arith.mulf %385, %384 : vector<4x256xf32>
    %387 = arith.addf %378, %386 : vector<4x256xf32>
    %c0_118 = arith.constant 0 : index
    %c35 = arith.constant 35 : index
    %388 = vector.load %arg5[%c0_118, %c35] : memref<4x36xf32, #tpu.memory_space<vmem>>, vector<4x1xf32>
    %c120_i32_119 = arith.constant 120 : i32
    %389 = tpu.dynamic_rotate %5 by %c120_i32_119 dim 1 : vector<4x256xf32>, i32 -> vector<4x256xf32>
    %390 = arith.andi %316, %312 : vector<1x256xi1>
    %cst_120 = arith.constant 0.000000e+00 : f32
    %391 = vector.shape_cast %390 : vector<1x256xi1> to vector<1x256xi1>
    %392 = vector.broadcast %391 : vector<1x256xi1> to vector<4x256xi1>
    %393 = vector.broadcast %cst_120 : f32 to vector<4x256xf32>
    %394 = arith.select %392, %389, %393 : vector<4x256xi1>, vector<4x256xf32>
    %395 = vector.broadcast %388 : vector<4x1xf32> to vector<4x256xf32>
    %396 = arith.mulf %395, %394 : vector<4x256xf32>
    %397 = arith.addf %387, %396 : vector<4x256xf32>
    %c0_121 = arith.constant 0 : index
    %c3_122 = arith.constant 3 : index
    %398 = vector.load %arg6[%c0_121, %c3_122] : memref<4x4xf32, #tpu.memory_space<vmem>>, vector<4x1xf32>
    %399 = vector.broadcast %398 : vector<4x1xf32> to vector<4x256xf32>
    %400 = arith.addf %397, %399 : vector<4x256xf32>
    %cst_123 = arith.constant 0.000000e+00 : f32
    %401 = vector.broadcast %cst_123 : f32 to vector<4x256xf32>
    %402 = arith.cmpf ogt, %400, %401 : vector<4x256xf32>
    %cst_124 = arith.constant 0.00999999977 : f32
    %403 = vector.broadcast %cst_124 : f32 to vector<4x256xf32>
    %404 = arith.mulf %403, %400 : vector<4x256xf32>
    %405 = arith.select %402, %400, %404 : vector<4x256xi1>, vector<4x256xf32>
    %c0_125 = arith.constant 0 : index
    %c12_126 = arith.constant 12 : index
    %406 = vector.load %arg7[%c0_125, %c12_126] : memref<8x16xf32, #tpu.memory_space<vmem>>, vector<8x4xf32>
    %cst_127 = arith.constant dense<0.000000e+00> : vector<8x256xf32>
    %407 = tpu.matmul %406, %405, %cst_127 {dimension_numbers = #tpu.dot_dimension_numbers<[1], [0], [0], [1], [0, 0, 1, 1], [], []>} : vector<8x4xf32>, vector<4x256xf32>, vector<8x256xf32> -> vector<8x256xf32>
    %408 = arith.addf %308, %407 : vector<8x256xf32>
    %c0_128 = arith.constant 0 : index
    %c0_129 = arith.constant 0 : index
    %409 = vector.load %arg8[%c0_128, %c0_129] : memref<8x1xf32, #tpu.memory_space<vmem>>, vector<8x1xf32>
    %410 = vector.broadcast %409 : vector<8x1xf32> to vector<8x256xf32>
    %411 = arith.addf %408, %410 : vector<8x256xf32>
    %cst_130 = arith.constant 0.000000e+00 : f32
    %412 = vector.broadcast %cst_130 : f32 to vector<8x256xf32>
    %413 = arith.cmpf ogt, %411, %412 : vector<8x256xf32>
    %cst_131 = arith.constant 0.00999999977 : f32
    %414 = vector.broadcast %cst_131 : f32 to vector<8x256xf32>
    %415 = arith.mulf %414, %411 : vector<8x256xf32>
    %416 = arith.select %413, %411, %415 : vector<8x256xi1>, vector<8x256xf32>
    %417 = arith.addf %416, %0 : vector<8x256xf32>
    %c0_132 = arith.constant 0 : index
    %c0_133 = arith.constant 0 : index
    %418 = vector.load %arg9[%c0_132, %c0_133] : memref<8x256xf32, #tpu.memory_space<vmem>>, vector<8x256xf32>
    tpu.vector_store %arg9[%c0_132, %c0_133], %417 {strides = array<i32>} : memref<8x256xf32, #tpu.memory_space<vmem>>, vector<8x256xf32>,
    return
  }
  func.func @transform_0(%arg0: i32) -> (i32, i32) {
    %c0_i32 = arith.constant 0 : i32
    %c0_i32_0 = arith.constant 0 : i32
    return %c0_i32, %arg0 : i32, i32
  }
  func.func @transform_1(%arg0: i32) -> (i32, i32) {
    %c0_i32 = arith.constant 0 : i32
    %c0_i32_0 = arith.constant 0 : i32
    return %c0_i32, %arg0 : i32, i32
  }
  func.func @transform_2(%arg0: i32) -> (i32, i32) {
    %c0_i32 = arith.constant 0 : i32
    %c0_i32_0 = arith.constant 0 : i32
    %c0_i32_1 = arith.constant 0 : i32
    return %c0_i32, %c0_i32_0 : i32, i32
  }
  func.func @transform_3(%arg0: i32) -> (i32, i32) {
    %c0_i32 = arith.constant 0 : i32
    %c0_i32_0 = arith.constant 0 : i32
    %c0_i32_1 = arith.constant 0 : i32
    return %c0_i32, %c0_i32_0 : i32, i32
  }
  func.func @transform_4(%arg0: i32) -> (i32, i32) {
    %c0_i32 = arith.constant 0 : i32
    %c0_i32_0 = arith.constant 0 : i32
    %c0_i32_1 = arith.constant 0 : i32
    return %c0_i32, %c0_i32_0 : i32, i32
  }
  func.func @transform_5(%arg0: i32) -> (i32, i32) {
    %c0_i32 = arith.constant 0 : i32
    %c0_i32_0 = arith.constant 0 : i32
    %c0_i32_1 = arith.constant 0 : i32
    return %c0_i32, %c0_i32_0 : i32, i32
  }
  func.func @transform_6(%arg0: i32) -> (i32, i32) {
    %c0_i32 = arith.constant 0 : i32
    %c0_i32_0 = arith.constant 0 : i32
    %c0_i32_1 = arith.constant 0 : i32
    return %c0_i32, %c0_i32_0 : i32, i32
  }
  func.func @transform_7(%arg0: i32) -> (i32, i32) {
    %c0_i32 = arith.constant 0 : i32
    %c0_i32_0 = arith.constant 0 : i32
    %c0_i32_1 = arith.constant 0 : i32
    return %c0_i32, %c0_i32_0 : i32, i32
  }
  func.func @transform_8(%arg0: i32) -> (i32, i32) {
    %c0_i32 = arith.constant 0 : i32
    %c0_i32_0 = arith.constant 0 : i32
    return %c0_i32, %arg0 : i32, i32
  }
}

</mosaic_0001>

<llo_original>
// kernel: tpu_custom_call.1
$region0: #{tpu_custom_call.1}
  #allocation0 [shape = 'u32[]', space=smem, size = 0x4, offset = 0x4, fixed_abs, tag = 'smem constant byte address 0x4 - core index']
  #allocation1 [shape = 'u32[144,128]{1,0:T(1,128)}', space=vmem, size = 0x12000, scoped, tag = 'internal scratch']
  %s0 = inlined_call_operand.hbm [shape: f32[8,512], index: 0, kind: input, shape index: {}]
  %s1 = inlined_call_operand.vmem [shape: s32[2,512], index: 1, kind: input, shape index: {}]
  %s2 = inlined_call_operand.vmem [shape: f32[4,8], index: 2, kind: input, shape index: {}]
  %s3 = inlined_call_operand.vmem [shape: f32[4,1], index: 3, kind: input, shape index: {}]
  %s4 = inlined_call_operand.vmem [shape: f32[4,36], index: 4, kind: input, shape index: {}]
  %s5 = inlined_call_operand.vmem [shape: f32[4,4], index: 5, kind: input, shape index: {}]
  %s6 = inlined_call_operand.vmem [shape: f32[8,16], index: 6, kind: input, shape index: {}]
  %s7 = inlined_call_operand.vmem [shape: f32[8,1], index: 7, kind: input, shape index: {}]
  %s8 = inlined_call_operand.hbm [shape: f32[8,512], index: 8, kind: output, shape index: {}]
  %s9 = sld [smem:[#allocation0]]
  $region69: #{tpu_custom_call.1} parent=0
    _
  %s11 = ssub.s32 1, %s9
  %s12 = scalar_select 0, %s11, %s9
  $region1: #{tpu_custom_call.1} parent=0
    #allocation2 [shape = 'u8[16384]{0}', space=vmem, size = 0x4000, scoped, tag = 'input window, operand 0']
    #allocation3 [shape = 's32[2]{0}', space=sflag, size = 0x8, scoped, tag = 'scoped memory for tpu_custom_call.1']
    #allocation4 [shape = 's32[2]{0}', space=sflag, size = 0x8, scoped, tag = 'scoped memory for tpu_custom_call.1']
    #allocation5 [shape = 'u8[16384]{0}', space=vmem, size = 0x4000, scoped, tag = 'output window, operand 0']
    %13 = vsyncpa [#allocation3], 0
    %s14 = scalar_lea.sflag [#allocation3], 1
    %15 = vsyncpa %s14, 0
    %16 = vsyncpa [#allocation4], 0
    %s17 = scalar_lea.sflag [#allocation4], 1
    %18 = vsyncpa %s17, 0
    loop: start=0, step=1, limit=4
    $region2: #{tpu_custom_call.1} parent=1 // loop_pre_header
      _
    $region3: #{tpu_custom_call.1} parent=1 // loop_header
      %s20 = sphi 0, %s24
      %p21 = scmp.ge.s32.totalorder %s20, 4
      %s30 = sphi 0, %s32
      %s33 = sphi 0, %s30
      %s34 = sphi 0, %s33
      %s50 = sphi 0, %s34
      %s56 = sphi 0, %s58
      %s59 = sphi 0, %s56
      %s60 = sphi 0, %s59
      %s76 = sphi 0, %s60
      %s80 = sphi 0, %s80
      %s82 = sphi 0, %s80
      %s83 = sphi 0, %s82
      %s97 = sphi 0, %s83
      %s101 = sphi 0, %s101
      %s103 = sphi 0, %s101
      %s104 = sphi 0, %s103
      %s118 = sphi 0, %s104
      %s122 = sphi 0, %s122
      %s124 = sphi 0, %s122
      %s125 = sphi 0, %s124
      %s139 = sphi 0, %s125
      %s143 = sphi 0, %s143
      %s145 = sphi 0, %s143
      %s146 = sphi 0, %s145
      %s160 = sphi 0, %s146
      %s164 = sphi 0, %s164
      %s166 = sphi 0, %s164
      %s167 = sphi 0, %s166
      %s181 = sphi 0, %s167
      %s185 = sphi 0, %s185
      %s187 = sphi 0, %s185
      %s188 = sphi 0, %s187
      %s202 = sphi 0, %s188
      %s208 = sphi 0, %s210
      %s211 = sphi 0, %s208
      %s212 = sphi 0, %s211
      %s228 = sphi 0, %s212
    $region4: #{tpu_custom_call.1} parent=1 // loop_header_branch
      %23 = sbr.rel (%p21) target = $region8
    $region5: #{tpu_custom_call.1} parent=1 // loop_body
      %s25 = ssub.s32 %s20, 1
      %s26 = ssub.s32 %s20, 2
      %s27 = sadd.s32 %s20, 1
      %s28 = ssub.s32 %s20, %s27
      %p29 = scmp.eq.s32.totalorder %s28, 0
      %s31 = sadd.s32 %s30, 1
      %s32 = scalar_select %p29, %s30, %s31
      %p35 = pneg %p29
      %p36 = scmp.eq.s32.totalorder %s20, 1
      %p37 = por %p35, %p36
      %p38 = scmp.ne.s32.totalorder %s30, %s33
      %p39 = scmp.eq.s32.totalorder %s20, 0
      %p40 = por %p38, %p39
      %p41 = scmp.ne.s32.totalorder %s30, %s33
      %p42 = scmp.eq.s32.totalorder %s25, 1
      %p43 = por %p41, %p42
      %p44 = scmp.ne.s32.totalorder %s33, %s34
      %p45 = scmp.eq.s32.totalorder %s25, 0
      %p46 = por %p44, %p45
      %p47 = scmp.ne.s32.totalorder %s33, %s34
      %p48 = scmp.eq.s32.totalorder %s26, 1
      %p49 = por %p47, %p48
      %p51 = scmp.ne.s32.totalorder %s34, %s50
      %p52 = scmp.eq.s32.totalorder %s26, 0
      %p53 = por %p51, %p52
      %s54 = ssub.s32 %s20, %s27
      %p55 = scmp.eq.s32.totalorder %s54, 0
      %s57 = sadd.s32 %s56, 1
      %s58 = scalar_select %p55, %s56, %s57
      %p61 = pneg %p55
      %p62 = scmp.eq.s32.totalorder %s20, 1
      %p63 = por %p61, %p62
      %p64 = scmp.ne.s32.totalorder %s56, %s59
      %p65 = scmp.eq.s32.totalorder %s20, 0
      %p66 = por %p64, %p65
      %p67 = scmp.ne.s32.totalorder %s56, %s59
      %p68 = scmp.eq.s32.totalorder %s25, 1
      %p69 = por %p67, %p68
      %p70 = scmp.ne.s32.totalorder %s59, %s60
      %p71 = scmp.eq.s32.totalorder %s25, 0
      %p72 = por %p70, %p71
      %p73 = scmp.ne.s32.totalorder %s59, %s60
      %p74 = scmp.eq.s32.totalorder %s26, 1
      %p75 = por %p73, %p74
      %p77 = scmp.ne.s32.totalorder %s60, %s76
      %p78 = scmp.eq.s32.totalorder %s26, 0
      %p79 = por %p77, %p78
      %s81 = sadd.s32 %s80, 1
      %p84 = scmp.eq.s32.totalorder %s20, 1
      %p85 = scmp.ne.s32.totalorder %s80, %s82
      %p86 = scmp.eq.s32.totalorder %s20, 0
      %p87 = por %p85, %p86
      %p88 = scmp.ne.s32.totalorder %s80, %s82
      %p89 = scmp.eq.s32.totalorder %s25, 1
      %p90 = por %p88, %p89
      %p91 = scmp.ne.s32.totalorder %s82, %s83
      %p92 = scmp.eq.s32.totalorder %s25, 0
      %p93 = por %p91, %p92
      %p94 = scmp.ne.s32.totalorder %s82, %s83
      %p95 = scmp.eq.s32.totalorder %s26, 1
      %p96 = por %p94, %p95
      %p98 = scmp.ne.s32.totalorder %s83, %s97
      %p99 = scmp.eq.s32.totalorder %s26, 0
      %p100 = por %p98, %p99
      %s102 = sadd.s32 %s101, 1
      %p105 = scmp.eq.s32.totalorder %s20, 1
      %p106 = scmp.ne.s32.totalorder %s101, %s103
      %p107 = scmp.eq.s32.totalorder %s20, 0
      %p108 = por %p106, %p107
      %p109 = scmp.ne.s32.totalorder %s101, %s103
      %p110 = scmp.eq.s32.totalorder %s25, 1
      %p111 = por %p109, %p110
      %p112 = scmp.ne.s32.totalorder %s103, %s104
      %p113 = scmp.eq.s32.totalorder %s25, 0
      %p114 = por %p112, %p113
      %p115 = scmp.ne.s32.totalorder %s103, %s104
      %p116 = scmp.eq.s32.totalorder %s26, 1
      %p117 = por %p115, %p116
      %p119 = scmp.ne.s32.totalorder %s104, %s118
      %p120 = scmp.eq.s32.totalorder %s26, 0
      %p121 = por %p119, %p120
      %s123 = sadd.s32 %s122, 1
      %p126 = scmp.eq.s32.totalorder %s20, 1
      %p127 = scmp.ne.s32.totalorder %s122, %s124
      %p128 = scmp.eq.s32.totalorder %s20, 0
      %p129 = por %p127, %p128
      %p130 = scmp.ne.s32.totalorder %s122, %s124
      %p131 = scmp.eq.s32.totalorder %s25, 1
      %p132 = por %p130, %p131
      %p133 = scmp.ne.s32.totalorder %s124, %s125
      %p134 = scmp.eq.s32.totalorder %s25, 0
      %p135 = por %p133, %p134
      %p136 = scmp.ne.s32.totalorder %s124, %s125
      %p137 = scmp.eq.s32.totalorder %s26, 1
      %p138 = por %p136, %p137
      %p140 = scmp.ne.s32.totalorder %s125, %s139
      %p141 = scmp.eq.s32.totalorder %s26, 0
      %p142 = por %p140, %p141
      %s144 = sadd.s32 %s143, 1
      %p147 = scmp.eq.s32.totalorder %s20, 1
      %p148 = scmp.ne.s32.totalorder %s143, %s145
      %p149 = scmp.eq.s32.totalorder %s20, 0
      %p150 = por %p148, %p149
      %p151 = scmp.ne.s32.totalorder %s143, %s145
      %p152 = scmp.eq.s32.totalorder %s25, 1
      %p153 = por %p151, %p152
      %p154 = scmp.ne.s32.totalorder %s145, %s146
      %p155 = scmp.eq.s32.totalorder %s25, 0
      %p156 = por %p154, %p155
      %p157 = scmp.ne.s32.totalorder %s145, %s146
      %p158 = scmp.eq.s32.totalorder %s26, 1
      %p159 = por %p157, %p158
      %p161 = scmp.ne.s32.totalorder %s146, %s160
      %p162 = scmp.eq.s32.totalorder %s26, 0
      %p163 = por %p161, %p162
      %s165 = sadd.s32 %s164, 1
      %p168 = scmp.eq.s32.totalorder %s20, 1
      %p169 = scmp.ne.s32.totalorder %s164, %s166
      %p170 = scmp.eq.s32.totalorder %s20, 0
      %p171 = por %p169, %p170
      %p172 = scmp.ne.s32.totalorder %s164, %s166
      %p173 = scmp.eq.s32.totalorder %s25, 1
      %p174 = por %p172, %p173
      %p175 = scmp.ne.s32.totalorder %s166, %s167
      %p176 = scmp.eq.s32.totalorder %s25, 0
      %p177 = por %p175, %p176
      %p178 = scmp.ne.s32.totalorder %s166, %s167
      %p179 = scmp.eq.s32.totalorder %s26, 1
      %p180 = por %p178, %p179
      %p182 = scmp.ne.s32.totalorder %s167, %s181
      %p183 = scmp.eq.s32.totalorder %s26, 0
      %p184 = por %p182, %p183
      %s186 = sadd.s32 %s185, 1
      %p189 = scmp.eq.s32.totalorder %s20, 1
      %p190 = scmp.ne.s32.totalorder %s185, %s187
      %p191 = scmp.eq.s32.totalorder %s20, 0
      %p192 = por %p190, %p191
      %p193 = scmp.ne.s32.totalorder %s185, %s187
      %p194 = scmp.eq.s32.totalorder %s25, 1
      %p195 = por %p193, %p194
      %p196 = scmp.ne.s32.totalorder %s187, %s188
      %p197 = scmp.eq.s32.totalorder %s25, 0
      %p198 = por %p196, %p197
      %p199 = scmp.ne.s32.totalorder %s187, %s188
      %p200 = scmp.eq.s32.totalorder %s26, 1
      %p201 = por %p199, %p200
      %p203 = scmp.ne.s32.totalorder %s188, %s202
      %p204 = scmp.eq.s32.totalorder %s26, 0
      %p205 = por %p203, %p204
      %s206 = ssub.s32 %s20, %s27
      %p207 = scmp.eq.s32.totalorder %s206, 0
      %s209 = sadd.s32 %s208, 1
      %s210 = scalar_select %p207, %s208, %s209
      %p213 = pneg %p207
      %p214 = scmp.eq.s32.totalorder %s20, 1
      %p215 = por %p213, %p214
      %p216 = scmp.ne.s32.totalorder %s208, %s211
      %p217 = scmp.eq.s32.totalorder %s20, 0
      %p218 = por %p216, %p217
      %p219 = scmp.ne.s32.totalorder %s208, %s211
      %p220 = scmp.eq.s32.totalorder %s25, 1
      %p221 = por %p219, %p220
      %p222 = scmp.ne.s32.totalorder %s211, %s212
      %p223 = scmp.eq.s32.totalorder %s25, 0
      %p224 = por %p222, %p223
      %p225 = scmp.ne.s32.totalorder %s211, %s212
      %p226 = scmp.eq.s32.totalorder %s26, 1
      %p227 = por %p225, %p226
      %p229 = scmp.ne.s32.totalorder %s212, %s228
      %p230 = scmp.eq.s32.totalorder %s26, 0
      %p231 = por %p229, %p230
      %p232 = scmp.le.s32.totalorder 1, %s20
      %p233 = scmp.lt.s32.totalorder %s20, 3
      %p234 = pnand %p232, %p233
      %p235 = pneg %p234
      // Predicated region
      $region9: #{tpu_custom_call.1} parent=5 // pred_check
        _
      $region10: #{tpu_custom_call.1} parent=5 // pred_check_branch
        %237 = sbr.rel (%p234) target = $region12
      $region11: #{tpu_custom_call.1} parent=5 // pred_region
        %s238 = ssub.s32 %s20, 1
        // Predicated region
        $region13: #{tpu_custom_call.1} parent=11 // pred_check
          %p239 = pneg %p93
        $region14: #{tpu_custom_call.1} parent=11 // pred_check_branch
          %241 = sbr.rel (%p239) target = $region16
        $region15: #{tpu_custom_call.1} parent=11 // pred_region
          _
        $region16: #{tpu_custom_call.1} parent=11 // pred_fallthru
          _
        // Predicated region
        $region17: #{tpu_custom_call.1} parent=11 // pred_check
          %p242 = pneg %p114
        $region18: #{tpu_custom_call.1} parent=11 // pred_check_branch
          %244 = sbr.rel (%p242) target = $region20
        $region19: #{tpu_custom_call.1} parent=11 // pred_region
          _
        $region20: #{tpu_custom_call.1} parent=11 // pred_fallthru
          _
        // Predicated region
        $region21: #{tpu_custom_call.1} parent=11 // pred_check
          %p245 = pneg %p135
        $region22: #{tpu_custom_call.1} parent=11 // pred_check_branch
          %247 = sbr.rel (%p245) target = $region24
        $region23: #{tpu_custom_call.1} parent=11 // pred_region
          _
        $region24: #{tpu_custom_call.1} parent=11 // pred_fallthru
          _
        // Predicated region
        $region25: #{tpu_custom_call.1} parent=11 // pred_check
          %p248 = pneg %p156
        $region26: #{tpu_custom_call.1} parent=11 // pred_check_branch
          %250 = sbr.rel (%p248) target = $region28
        $region27: #{tpu_custom_call.1} parent=11 // pred_region
          _
        $region28: #{tpu_custom_call.1} parent=11 // pred_fallthru
          _
        // Predicated region
        $region29: #{tpu_custom_call.1} parent=11 // pred_check
          %p251 = pneg %p177
        $region30: #{tpu_custom_call.1} parent=11 // pred_check_branch
          %253 = sbr.rel (%p251) target = $region32
        $region31: #{tpu_custom_call.1} parent=11 // pred_region
          _
        $region32: #{tpu_custom_call.1} parent=11 // pred_fallthru
          _
        // Predicated region
        $region33: #{tpu_custom_call.1} parent=11 // pred_check
          %p254 = pneg %p198
        $region34: #{tpu_custom_call.1} parent=11 // pred_check_branch
          %256 = sbr.rel (%p254) target = $region36
        $region35: #{tpu_custom_call.1} parent=11 // pred_region
          _
        $region36: #{tpu_custom_call.1} parent=11 // pred_fallthru
          _
      $region12: #{tpu_custom_call.1} parent=5 // pred_fallthru
        _
      %p257 = scmp.lt.s32.totalorder %s20, 2
      // Predicated region
      $region37: #{tpu_custom_call.1} parent=5 // pred_check
        %p258 = pneg %p257
      $region38: #{tpu_custom_call.1} parent=5 // pred_check_branch
        %260 = sbr.rel (%p258) target = $region40
      $region39: #{tpu_custom_call.1} parent=5 // pred_region
        // Predicated region
        $region41: #{tpu_custom_call.1} parent=39 // pred_check
          %p261 = pneg %p40
        $region42: #{tpu_custom_call.1} parent=39 // pred_check_branch
          %263 = sbr.rel (%p261) target = $region44
        $region43: #{tpu_custom_call.1} parent=39 // pred_region
          %s264 = sand.u32 %s30, 1
          %s265 = scalar_lea.sflag [#allocation3], %s264
          %s266 = sand.u32 %s30, 1
          %s267 = smul.addr %s266, 16
          %s268 = scalar_lea.vmem [#allocation2], %s267
          %s269 = smul.u32 2, %s20
          %s271 = ssub.s32 256, 256
          %272 = vsyncadd %s265, %s271
          %s273 = smul.addr %s269, 128
          %s274 = scalar_lea.hbm %s0, %s273
          %s276 = sshll.u32 %s268, 4
          %s277 = int_to_ptr.vmem [resolvable:$true] %s276
          %279 = dma.hbm_to_vmem [thread:$0]  %s274, 256, %s277, %s265
        $region44: #{tpu_custom_call.1} parent=39 // pred_fallthru
          _
        // Predicated region
        $region45: #{tpu_custom_call.1} parent=39 // pred_check
          %p280 = pneg %p66
        $region46: #{tpu_custom_call.1} parent=39 // pred_check_branch
          %282 = sbr.rel (%p280) target = $region48
        $region47: #{tpu_custom_call.1} parent=39 // pred_region
          %s283 = smul.u32 2, %s20
          %p284 = scmp.lt.s32.totalorder %s283, 3
          %s285 = scalar_select %p284, %s283, 3
          %s286 = smul.addr %s285, 2
          %s287 = scalar_lea.vmem %s1, %s286
          %s288 = smul.u32 2, %s20
        $region48: #{tpu_custom_call.1} parent=39 // pred_fallthru
          _
      $region40: #{tpu_custom_call.1} parent=5 // pred_fallthru
        _
      %p289 = scmp.le.s32.totalorder 1, %s20
      %p290 = scmp.lt.s32.totalorder %s20, 3
      %p291 = pnand %p289, %p290
      %p292 = pneg %p291
      // Predicated region
      $region49: #{tpu_custom_call.1} parent=5 // pred_check
        _
      $region50: #{tpu_custom_call.1} parent=5 // pred_check_branch
        %294 = sbr.rel (%p291) target = $region52
      $region51: #{tpu_custom_call.1} parent=5 // pred_region
        %s295 = ssub.s32 %s20, 1
        %s296 = sand.u32 %s33, 1
        %s297 = scalar_lea.sflag [#allocation3], %s296
        %s298 = sand.u32 %s33, 1
        %s299 = smul.addr %s298, 16
        %s300 = scalar_lea.vmem [#allocation2], %s299
        // Predicated region
        $region53: #{tpu_custom_call.1} parent=51 // pred_check
          %p301 = pneg %p46
        $region54: #{tpu_custom_call.1} parent=51 // pred_check_branch
          %303 = sbr.rel (%p301) target = $region56
        $region55: #{tpu_custom_call.1} parent=51 // pred_region
          %304 = dma.done %s297, 256
        $region56: #{tpu_custom_call.1} parent=51 // pred_fallthru
          _
        %s305 = sand.u32 %s33, 1
        %s306 = scalar_lea.sflag [#allocation3], %s305
        %s307 = sand.u32 %s33, 1
        %s308 = smul.addr %s307, 16
        %s309 = scalar_lea.vmem [#allocation2], %s308
        %p310 = pneg %p46
        %p311 = pneg %p43
        %s312 = smul.u32 2, %s25
        %p313 = scmp.lt.s32.totalorder %s312, 3
        %s314 = scalar_select %p313, %s312, 3
        %s315 = smul.addr %s314, 2
        %s316 = scalar_lea.vmem %s1, %s315
        %p317 = pneg %p72
        %p318 = pneg %p69
        %p319 = pneg %p93
        %p320 = pneg %p90
        %p321 = pneg %p114
        %p322 = pneg %p111
        %p323 = pneg %p135
        %p324 = pneg %p132
        %p325 = pneg %p156
        %p326 = pneg %p153
        %p327 = pneg %p177
        %p328 = pneg %p174
        %p329 = pneg %p198
        %p330 = pneg %p195
        %p331 = pneg %p224
        %p332 = pneg %p221
        %s333 = sand.u32 %s211, 1
        %s334 = scalar_lea.sflag [#allocation4], %s333
        %s335 = sand.u32 %s211, 1
        %s336 = smul.addr %s335, 16
        %s337 = scalar_lea.vmem [#allocation5], %s336
        %s338 = smul.u32 2, %s25
        %s339 = smul.u32 2, %s25
        %p340 = scmp.lt.s32.totalorder %s339, 3
        %s341 = scalar_select %p340, %s339, 3
        %s342 = smul.addr %s341, 2
        %s343 = scalar_lea.vmem %s1, %s342
        %s344 = smul.u32 2, %s25
        %s345 = smul.u32 2, %s25
        %v346 = vld [vmem:[%s300] sm:$0xff]
        %v347 = vld [vmem:[%s300 + $0x8] sm:$0xff]
        %v348 = vld [vmem:[%s2] sm:$0xf]
        %v349 = vld [vmem:[%s3] sm:$0xf]
        %351 = vset.pattern.permute.xlu0 0
        %352 = vperm.xlu0 %351, %v349
        %v353 = vpop.permute.xlu0 %352
        %vm355 = vcmask 64512
        %v357 = vsel %vm355, %v348, 0
        %359 = vmatprep.subr.mxu0 %v347
        %360 = vmatpush1.msra.mxu0 %v346
        %361 = vmatprep.subr.mxu0 0.0
        %362 = vmatpush1.msra.mxu0 0.0
        %363 = vmatprep.subr.mxu0 0.0
        %364 = vmatpush1.msra.mxu0 0.0
        %365 = vmatprep.subr.mxu0 0.0
        %366 = vmatpush1.msra.mxu0 0.0
        %367 = vmatprep.subr.mxu0 0.0
        %368 = vmatpush1.msra.mxu0 0.0
        %369 = vmatprep.subr.mxu0 0.0
        %370 = vmatpush1.msra.mxu0 0.0
        %371 = vmatprep.subr.mxu0 0.0
        %372 = vmatpush1.msra.mxu0 0.0
        %373 = vmatprep.subr.mxu0 0.0
        %374 = vmatpush1.msra.mxu0 0.0
        %375 = vmatprep.subr.mxu0 0.0
        %376 = vmatpush1.msra.mxu0 0.0
        %377 = vmatprep.subr.mxu0 0.0
        %378 = vmatpush1.msra.mxu0 0.0
        %379 = vmatprep.subr.mxu0 0.0
        %380 = vmatpush1.msra.mxu0 0.0
        %381 = vmatprep.subr.mxu0 0.0
        %382 = vmatpush1.msra.mxu0 0.0
        %383 = vmatprep.subr.mxu0 0.0
        %384 = vmatpush1.msra.mxu0 0.0
        %385 = vmatprep.subr.mxu0 0.0
        %386 = vmatpush1.msra.mxu0 0.0
        %387 = vmatprep.subr.mxu0 0.0
        %388 = vmatpush1.msra.mxu0 0.0
        %389 = vmatprep.subr.mxu0 0.0
        %390 = vmatpush1.msra.mxu0 0.0
        %391 = vmatprep.subr.mxu0 0.0
        %392 = vmatpush1.msra.mxu0 0.0
        %393 = vmatprep.subr.mxu0 0.0
        %394 = vmatpush1.msra.mxu0 0.0
        %395 = vmatprep.subr.mxu0 0.0
        %396 = vmatpush1.msra.mxu0 0.0
        %397 = vmatprep.subr.mxu0 0.0
        %398 = vmatpush1.msra.mxu0 0.0
        %399 = vmatprep.subr.mxu0 0.0
        %400 = vmatpush1.msra.mxu0 0.0
        %401 = vmatprep.subr.mxu0 0.0
        %402 = vmatpush1.msra.mxu0 0.0
        %403 = vmatprep.subr.mxu0 0.0
        %404 = vmatpush1.msra.mxu0 0.0
        %405 = vmatprep.subr.mxu0 0.0
        %406 = vmatpush1.msra.mxu0 0.0
        %407 = vmatprep.subr.mxu0 0.0
        %408 = vmatpush1.msra.mxu0 0.0
        %409 = vmatprep.subr.mxu0 0.0
        %410 = vmatpush1.msra.mxu0 0.0
        %411 = vmatprep.subr.mxu0 0.0
        %412 = vmatpush1.msra.mxu0 0.0
        %413 = vmatprep.subr.mxu0 0.0
        %414 = vmatpush1.msra.mxu0 0.0
        %415 = vmatprep.subr.mxu0 0.0
        %416 = vmatpush1.msra.mxu0 0.0
        %417 = vmatprep.subr.mxu0 0.0
        %418 = vmatpush1.msra.mxu0 0.0
        %419 = vmatprep.subr.mxu0 0.0
        %420 = vmatpush1.msra.mxu0 0.0
        %421 = vmatprep.subr.mxu0 0.0
        %422 = vmatpush1.msra.mxu0 0.0
        %423 = vmatprep.mubr.f32.mxu0 0.0
        %424 = vmatmul.mubr.f32.gmra.mrb[0].mxu0 %v357
        %v425 = vpop.f32.mrb[0].mxu0
        %v426 = vadd.f32 %v353, %v425
        %v427 = vpop.f32.mrb[0].mxu0
        %v428 = vadd.f32 %v353, %v427
        %429 = vdwg.mxu0
        %v430 = vld [vmem:[%s343] ss:$2 sm:$0x3]
        %s431 = scalar_lea.vmem %s343, 1
        %v432 = vld [vmem:[%s431] ss:$2 sm:$0x3]
        %vm433 = vcmp.ge.s32.totalorder %v432, 1
        %vm434 = vcmp.lt.s32.totalorder %v432, 15
        %vm435 = vcmp.ge.s32.totalorder %v430, 1
        %vm436 = vcmp.lt.s32.totalorder %v430, 15
        %v437 = vld [vmem:[%s4] sm:$0xf]
        %438 = vrot.lane.b32.xlu0 %v426, 17
        %v439 = vpop.permute.xlu0 %438
        %440 = vrot.lane.b32.xlu0 %v428, 17
        %v441 = vpop.permute.xlu0 %440
        %v442 = vlaneseq
        %v443 = vand.u32 %v442, 127
        %vm444 = vcmp.lt.s32.totalorder %v443, 17
        %v445 = vsel %vm444, %v439, %v441
        %v446 = vsel %vm444, %v441, %v439
        %vm447 = vmand %vm435, %vm433
        %v448 = vsel %vm447, 1, 0
        %v449 = vlaneseq
        %v450 = vshrl.u32 %v449, 7
        %v451 = vsub.s32 0, %v450
        %v452 = vrot.slane %v448, %v451
        %v453 = vlaneseq
        %v454 = vshrl.u32 %v453, 7
        %v455 = vsub.s32 1, %v454
        %v456 = vrot.slane %v448, %v455
        %vm457 = vcmp.eq.s32.totalorder %v452, 1
        %vm458 = vcmp.eq.s32.totalorder %v456, 1
        %v459 = vsel %vm457, %v446, 0.0
        %v460 = vsel %vm458, %v445, 0.0
        %462 = vset.pattern.permute.xlu0 0
        %463 = vperm.xlu0 %462, %v437
        %v464 = vpop.permute.xlu0 %463
        %v466 = vmul.f32 %v464, %v459
        %v467 = vmul.f32 %v464, %v460
        %v468 = vadd.f32 %v466, 0.0
        %v469 = vadd.f32 %v467, 0.0
        %470 = vrot.lane.b32.xlu0 %v426, 16
        %v471 = vpop.permute.xlu0 %470
        %472 = vrot.lane.b32.xlu0 %v428, 16
        %v473 = vpop.permute.xlu0 %472
        %vm474 = vcmp.lt.s32.totalorder %v443, 16
        %v475 = vsel %vm474, %v471, %v473
        %v476 = vsel %vm474, %v473, %v471
        %v477 = vsel %vm435, 1, 0
        %v478 = vlaneseq
        %v479 = vshrl.u32 %v478, 7
        %v480 = vsub.s32 0, %v479
        %v481 = vrot.slane %v477, %v480
        %v482 = vlaneseq
        %v483 = vshrl.u32 %v482, 7
        %v484 = vsub.s32 1, %v483
        %v485 = vrot.slane %v477, %v484
        %vm486 = vcmp.eq.s32.totalorder %v481, 1
        %vm487 = vcmp.eq.s32.totalorder %v485, 1
        %v488 = vsel %vm486, %v476, 0.0
        %v489 = vsel %vm487, %v475, 0.0
        %490 = vset.pattern.permute.xlu0 1
        %491 = vperm.xlu0 %490, %v437
        %v492 = vpop.permute.xlu0 %491
        %v494 = vmul.f32 %v492, %v488
        %v495 = vmul.f32 %v492, %v489
        %v496 = vadd.f32 %v468, %v494
        %v497 = vadd.f32 %v469, %v495
        %498 = vrot.lane.b32.xlu0 %v426, 15
        %v499 = vpop.permute.xlu0 %498
        %500 = vrot.lane.b32.xlu0 %v428, 15
        %v501 = vpop.permute.xlu0 %500
        %vm502 = vcmp.lt.s32.totalorder %v443, 15
        %v503 = vsel %vm502, %v499, %v501
        %v504 = vsel %vm502, %v501, %v499
        %vm505 = vmand %vm435, %vm434
        %v506 = vsel %vm505, 1, 0
        %v507 = vlaneseq
        %v508 = vshrl.u32 %v507, 7
        %v509 = vsub.s32 0, %v508
        %v510 = vrot.slane %v506, %v509
        %v511 = vlaneseq
        %v512 = vshrl.u32 %v511, 7
        %v513 = vsub.s32 1, %v512
        %v514 = vrot.slane %v506, %v513
        %vm515 = vcmp.eq.s32.totalorder %v510, 1
        %vm516 = vcmp.eq.s32.totalorder %v514, 1
        %v517 = vsel %vm515, %v504, 0.0
        %v518 = vsel %vm516, %v503, 0.0
        %519 = vset.pattern.permute.xlu0 2
        %520 = vperm.xlu0 %519, %v437
        %v521 = vpop.permute.xlu0 %520
        %v523 = vmul.f32 %v521, %v517
        %v524 = vmul.f32 %v521, %v518
        %v525 = vadd.f32 %v496, %v523
        %v526 = vadd.f32 %v497, %v524
        %527 = vrot.lane.b32.xlu0 %v426, 1
        %v528 = vpop.permute.xlu0 %527
        %529 = vrot.lane.b32.xlu0 %v428, 1
        %v530 = vpop.permute.xlu0 %529
        %vm531 = vcmp.lt.s32.totalorder %v443, 1
        %v532 = vsel %vm531, %v528, %v530
        %v533 = vsel %vm531, %v530, %v528
        %v534 = vsel %vm433, 1, 0
        %v535 = vlaneseq
        %v536 = vshrl.u32 %v535, 7
        %v537 = vsub.s32 0, %v536
        %v538 = vrot.slane %v534, %v537
        %v539 = vlaneseq
        %v540 = vshrl.u32 %v539, 7
        %v541 = vsub.s32 1, %v540
        %v542 = vrot.slane %v534, %v541
        %vm543 = vcmp.eq.s32.totalorder %v538, 1
        %vm544 = vcmp.eq.s32.totalorder %v542, 1
        %v545 = vsel %vm543, %v533, 0.0
        %v546 = vsel %vm544, %v532, 0.0
        %547 = vset.pattern.permute.xlu0 3
        %548 = vperm.xlu0 %547, %v437
        %v549 = vpop.permute.xlu0 %548
        %v551 = vmul.f32 %v549, %v545
        %v552 = vmul.f32 %v549, %v546
        %v553 = vadd.f32 %v525, %v551
        %v554 = vadd.f32 %v526, %v552
        %555 = vset.pattern.permute.xlu0 4
        %556 = vperm.xlu0 %555, %v437
        %v557 = vpop.permute.xlu0 %556
        %v559 = vmul.f32 %v557, %v426
        %v560 = vmul.f32 %v557, %v428
        %v561 = vadd.f32 %v553, %v559
        %v562 = vadd.f32 %v554, %v560
        %563 = vrot.lane.b32.xlu0 %v426, 127
        %v564 = vpop.permute.xlu0 %563
        %565 = vrot.lane.b32.xlu0 %v428, 127
        %v566 = vpop.permute.xlu0 %565
        %vm567 = vcmp.lt.s32.totalorder %v443, 127
        %v568 = vsel %vm567, %v564, %v566
        %v569 = vsel %vm567, %v566, %v564
        %v570 = vsel %vm434, 1, 0
        %v571 = vlaneseq
        %v572 = vshrl.u32 %v571, 7
        %v573 = vsub.s32 0, %v572
        %v574 = vrot.slane %v570, %v573
        %v575 = vlaneseq
        %v576 = vshrl.u32 %v575, 7
        %v577 = vsub.s32 1, %v576
        %v578 = vrot.slane %v570, %v577
        %vm579 = vcmp.eq.s32.totalorder %v574, 1
        %vm580 = vcmp.eq.s32.totalorder %v578, 1
        %v581 = vsel %vm579, %v568, 0.0
        %v582 = vsel %vm580, %v569, 0.0
        %583 = vset.pattern.permute.xlu0 5
        %584 = vperm.xlu0 %583, %v437
        %v585 = vpop.permute.xlu0 %584
        %v587 = vmul.f32 %v585, %v581
        %v588 = vmul.f32 %v585, %v582
        %v589 = vadd.f32 %v561, %v587
        %v590 = vadd.f32 %v562, %v588
        %591 = vrot.lane.b32.xlu0 %v426, 113
        %v592 = vpop.permute.xlu0 %591
        %593 = vrot.lane.b32.xlu0 %v428, 113
        %v594 = vpop.permute.xlu0 %593
        %vm595 = vcmp.lt.s32.totalorder %v443, 113
        %v596 = vsel %vm595, %v592, %v594
        %v597 = vsel %vm595, %v594, %v592
        %vm598 = vmand %vm436, %vm433
        %v599 = vsel %vm598, 1, 0
        %v600 = vlaneseq
        %v601 = vshrl.u32 %v600, 7
        %v602 = vsub.s32 0, %v601
        %v603 = vrot.slane %v599, %v602
        %v604 = vlaneseq
        %v605 = vshrl.u32 %v604, 7
        %v606 = vsub.s32 1, %v605
        %v607 = vrot.slane %v599, %v606
        %vm608 = vcmp.eq.s32.totalorder %v603, 1
        %vm609 = vcmp.eq.s32.totalorder %v607, 1
        %v610 = vsel %vm608, %v596, 0.0
        %v611 = vsel %vm609, %v597, 0.0
        %612 = vset.pattern.permute.xlu0 6
        %613 = vperm.xlu0 %612, %v437
        %v614 = vpop.permute.xlu0 %613
        %v616 = vmul.f32 %v614, %v610
        %v617 = vmul.f32 %v614, %v611
        %v618 = vadd.f32 %v589, %v616
        %v619 = vadd.f32 %v590, %v617
        %620 = vrot.lane.b32.xlu0 %v426, 112
        %v621 = vpop.permute.xlu0 %620
        %622 = vrot.lane.b32.xlu0 %v428, 112
        %v623 = vpop.permute.xlu0 %622
        %vm624 = vcmp.lt.s32.totalorder %v443, 112
        %v625 = vsel %vm624, %v621, %v623
        %v626 = vsel %vm624, %v623, %v621
        %v627 = vsel %vm436, 1, 0
        %v628 = vlaneseq
        %v629 = vshrl.u32 %v628, 7
        %v630 = vsub.s32 0, %v629
        %v631 = vrot.slane %v627, %v630
        %v632 = vlaneseq
        %v633 = vshrl.u32 %v632, 7
        %v634 = vsub.s32 1, %v633
        %v635 = vrot.slane %v627, %v634
        %vm636 = vcmp.eq.s32.totalorder %v631, 1
        %vm637 = vcmp.eq.s32.totalorder %v635, 1
        %v638 = vsel %vm636, %v625, 0.0
        %v639 = vsel %vm637, %v626, 0.0
        %640 = vset.pattern.permute.xlu0 7
        %641 = vperm.xlu0 %640, %v437
        %v642 = vpop.permute.xlu0 %641
        %v644 = vmul.f32 %v642, %v638
        %v645 = vmul.f32 %v642, %v639
        %v646 = vadd.f32 %v618, %v644
        %v647 = vadd.f32 %v619, %v645
        %648 = vrot.lane.b32.xlu0 %v426, 111
        %v649 = vpop.permute.xlu0 %648
        %650 = vrot.lane.b32.xlu0 %v428, 111
        %v651 = vpop.permute.xlu0 %650
        %vm652 = vcmp.lt.s32.totalorder %v443, 111
        %v653 = vsel %vm652, %v649, %v651
        %v654 = vsel %vm652, %v651, %v649
        %vm655 = vmand %vm436, %vm434
        %v656 = vsel %vm655, 1, 0
        %v657 = vlaneseq
        %v658 = vshrl.u32 %v657, 7
        %v659 = vsub.s32 0, %v658
        %v660 = vrot.slane %v656, %v659
        %v661 = vlaneseq
        %v662 = vshrl.u32 %v661, 7
        %v663 = vsub.s32 1, %v662
        %v664 = vrot.slane %v656, %v663
        %vm665 = vcmp.eq.s32.totalorder %v660, 1
        %vm666 = vcmp.eq.s32.totalorder %v664, 1
        %v667 = vsel %vm665, %v653, 0.0
        %v668 = vsel %vm666, %v654, 0.0
        %669 = vset.pattern.permute.xlu0 8
        %670 = vperm.xlu0 %669, %v437
        %v671 = vpop.permute.xlu0 %670
        %v673 = vmul.f32 %v671, %v667
        %v674 = vmul.f32 %v671, %v668
        %v675 = vadd.f32 %v646, %v673
        %v676 = vadd.f32 %v647, %v674
        %v677 = vld [vmem:[%s5] sm:$0xf]
        %679 = vset.pattern.permute.xlu0 0
        %680 = vperm.xlu0 %679, %v677
        %v681 = vpop.permute.xlu0 %680
        %v683 = vadd.f32 %v675, %v681
        %v684 = vadd.f32 %v676, %v681
        %vm685 = vcmp.gt.f32.partialorder %v683, 0.0
        %vm686 = vcmp.gt.f32.partialorder %v684, 0.0
        %v687 = vmul.f32 %v683, 0.01
        %v688 = vmul.f32 %v684, 0.01
        %v689 = vsel %vm685, %v683, %v687
        %v690 = vsel %vm686, %v684, %v688
        %v691 = vld [vmem:[%s6] sm:$0xff]
        %vm692 = vcmp.ge.s32.totalorder %v432, 2
        %vm693 = vcmp.lt.s32.totalorder %v432, 14
        %vm694 = vcmp.ge.s32.totalorder %v430, 2
        %vm695 = vcmp.lt.s32.totalorder %v430, 14
        %696 = vrot.lane.b32.xlu0 %v426, 34
        %v697 = vpop.permute.xlu0 %696
        %698 = vrot.lane.b32.xlu0 %v428, 34
        %v699 = vpop.permute.xlu0 %698
        %vm700 = vcmp.lt.s32.totalorder %v443, 34
        %v701 = vsel %vm700, %v697, %v699
        %v702 = vsel %vm700, %v699, %v697
        %vm703 = vmand %vm694, %vm692
        %v704 = vsel %vm703, 1, 0
        %v705 = vlaneseq
        %v706 = vshrl.u32 %v705, 7
        %v707 = vsub.s32 0, %v706
        %v708 = vrot.slane %v704, %v707
        %v709 = vlaneseq
        %v710 = vshrl.u32 %v709, 7
        %v711 = vsub.s32 1, %v710
        %v712 = vrot.slane %v704, %v711
        %vm713 = vcmp.eq.s32.totalorder %v708, 1
        %vm714 = vcmp.eq.s32.totalorder %v712, 1
        %v715 = vsel %vm713, %v702, 0.0
        %v716 = vsel %vm714, %v701, 0.0
        %717 = vset.pattern.permute.xlu0 9
        %718 = vperm.xlu0 %717, %v437
        %v719 = vpop.permute.xlu0 %718
        %v721 = vmul.f32 %v719, %v715
        %v722 = vmul.f32 %v719, %v716
        %v723 = vadd.f32 %v721, 0.0
        %v724 = vadd.f32 %v722, 0.0
        %725 = vrot.lane.b32.xlu0 %v426, 32
        %v726 = vpop.permute.xlu0 %725
        %727 = vrot.lane.b32.xlu0 %v428, 32
        %v728 = vpop.permute.xlu0 %727
        %vm729 = vcmp.lt.s32.totalorder %v443, 32
        %v730 = vsel %vm729, %v726, %v728
        %v731 = vsel %vm729, %v728, %v726
        %v732 = vsel %vm694, 1, 0
        %v733 = vlaneseq
        %v734 = vshrl.u32 %v733, 7
        %v735 = vsub.s32 0, %v734
        %v736 = vrot.slane %v732, %v735
        %v737 = vlaneseq
        %v738 = vshrl.u32 %v737, 7
        %v739 = vsub.s32 1, %v738
        %v740 = vrot.slane %v732, %v739
        %vm741 = vcmp.eq.s32.totalorder %v736, 1
        %vm742 = vcmp.eq.s32.totalorder %v740, 1
        %v743 = vsel %vm741, %v731, 0.0
        %v744 = vsel %vm742, %v730, 0.0
        %745 = vset.pattern.permute.xlu0 10
        %746 = vperm.xlu0 %745, %v437
        %v747 = vpop.permute.xlu0 %746
        %v749 = vmul.f32 %v747, %v743
        %v750 = vmul.f32 %v747, %v744
        %v751 = vadd.f32 %v723, %v749
        %v752 = vadd.f32 %v724, %v750
        %753 = vrot.lane.b32.xlu0 %v426, 30
        %v754 = vpop.permute.xlu0 %753
        %755 = vrot.lane.b32.xlu0 %v428, 30
        %v756 = vpop.permute.xlu0 %755
        %vm757 = vcmp.lt.s32.totalorder %v443, 30
        %v758 = vsel %vm757, %v754, %v756
        %v759 = vsel %vm757, %v756, %v754
        %vm760 = vmand %vm694, %vm693
        %v761 = vsel %vm760, 1, 0
        %v762 = vlaneseq
        %v763 = vshrl.u32 %v762, 7
        %v764 = vsub.s32 0, %v763
        %v765 = vrot.slane %v761, %v764
        %v766 = vlaneseq
        %v767 = vshrl.u32 %v766, 7
        %v768 = vsub.s32 1, %v767
        %v769 = vrot.slane %v761, %v768
        %vm770 = vcmp.eq.s32.totalorder %v765, 1
        %vm771 = vcmp.eq.s32.totalorder %v769, 1
        %v772 = vsel %vm770, %v759, 0.0
        %v773 = vsel %vm771, %v758, 0.0
        %774 = vset.pattern.permute.xlu0 11
        %775 = vperm.xlu0 %774, %v437
        %v776 = vpop.permute.xlu0 %775
        %v778 = vmul.f32 %v776, %v772
        %v779 = vmul.f32 %v776, %v773
        %v780 = vadd.f32 %v751, %v778
        %v781 = vadd.f32 %v752, %v779
        %782 = vrot.lane.b32.xlu0 %v426, 2
        %v783 = vpop.permute.xlu0 %782
        %784 = vrot.lane.b32.xlu0 %v428, 2
        %v785 = vpop.permute.xlu0 %784
        %vm786 = vcmp.lt.s32.totalorder %v443, 2
        %v787 = vsel %vm786, %v783, %v785
        %v788 = vsel %vm786, %v785, %v783
        %v789 = vsel %vm692, 1, 0
        %v790 = vlaneseq
        %v791 = vshrl.u32 %v790, 7
        %v792 = vsub.s32 0, %v791
        %v793 = vrot.slane %v789, %v792
        %v794 = vlaneseq
        %v795 = vshrl.u32 %v794, 7
        %v796 = vsub.s32 1, %v795
        %v797 = vrot.slane %v789, %v796
        %vm798 = vcmp.eq.s32.totalorder %v793, 1
        %vm799 = vcmp.eq.s32.totalorder %v797, 1
        %v800 = vsel %vm798, %v788, 0.0
        %v801 = vsel %vm799, %v787, 0.0
        %802 = vset.pattern.permute.xlu0 12
        %803 = vperm.xlu0 %802, %v437
        %v804 = vpop.permute.xlu0 %803
        %v806 = vmul.f32 %v804, %v800
        %v807 = vmul.f32 %v804, %v801
        %v808 = vadd.f32 %v780, %v806
        %v809 = vadd.f32 %v781, %v807
        %810 = vset.pattern.permute.xlu0 13
        %811 = vperm.xlu0 %810, %v437
        %v812 = vpop.permute.xlu0 %811
        %v814 = vmul.f32 %v812, %v426
        %v815 = vmul.f32 %v812, %v428
        %v816 = vadd.f32 %v808, %v814
        %v817 = vadd.f32 %v809, %v815
        %818 = vrot.lane.b32.xlu0 %v426, 126
        %v819 = vpop.permute.xlu0 %818
        %820 = vrot.lane.b32.xlu0 %v428, 126
        %v821 = vpop.permute.xlu0 %820
        %vm822 = vcmp.lt.s32.totalorder %v443, 126
        %v823 = vsel %vm822, %v819, %v821
        %v824 = vsel %vm822, %v821, %v819
        %v825 = vsel %vm693, 1, 0
        %v826 = vlaneseq
        %v827 = vshrl.u32 %v826, 7
        %v828 = vsub.s32 0, %v827
        %v829 = vrot.slane %v825, %v828
        %v830 = vlaneseq
        %v831 = vshrl.u32 %v830, 7
        %v832 = vsub.s32 1, %v831
        %v833 = vrot.slane %v825, %v832
        %vm834 = vcmp.eq.s32.totalorder %v829, 1
        %vm835 = vcmp.eq.s32.totalorder %v833, 1
        %v836 = vsel %vm834, %v823, 0.0
        %v837 = vsel %vm835, %v824, 0.0
        %838 = vset.pattern.permute.xlu0 14
        %839 = vperm.xlu0 %838, %v437
        %v840 = vpop.permute.xlu0 %839
        %v842 = vmul.f32 %v840, %v836
        %v843 = vmul.f32 %v840, %v837
        %v844 = vadd.f32 %v816, %v842
        %v845 = vadd.f32 %v817, %v843
        %846 = vrot.lane.b32.xlu0 %v426, 98
        %v847 = vpop.permute.xlu0 %846
        %848 = vrot.lane.b32.xlu0 %v428, 98
        %v849 = vpop.permute.xlu0 %848
        %vm850 = vcmp.lt.s32.totalorder %v443, 98
        %v851 = vsel %vm850, %v847, %v849
        %v852 = vsel %vm850, %v849, %v847
        %vm853 = vmand %vm695, %vm692
        %v854 = vsel %vm853, 1, 0
        %v855 = vlaneseq
        %v856 = vshrl.u32 %v855, 7
        %v857 = vsub.s32 0, %v856
        %v858 = vrot.slane %v854, %v857
        %v859 = vlaneseq
        %v860 = vshrl.u32 %v859, 7
        %v861 = vsub.s32 1, %v860
        %v862 = vrot.slane %v854, %v861
        %vm863 = vcmp.eq.s32.totalorder %v858, 1
        %vm864 = vcmp.eq.s32.totalorder %v862, 1
        %v865 = vsel %vm863, %v851, 0.0
        %v866 = vsel %vm864, %v852, 0.0
        %867 = vset.pattern.permute.xlu0 15
        %868 = vperm.xlu0 %867, %v437
        %v869 = vpop.permute.xlu0 %868
        %v871 = vmul.f32 %v869, %v865
        %v872 = vmul.f32 %v869, %v866
        %v873 = vadd.f32 %v844, %v871
        %v874 = vadd.f32 %v845, %v872
        %875 = vrot.lane.b32.xlu0 %v426, 96
        %v876 = vpop.permute.xlu0 %875
        %877 = vrot.lane.b32.xlu0 %v428, 96
        %v878 = vpop.permute.xlu0 %877
        %vm879 = vcmp.lt.s32.totalorder %v443, 96
        %v880 = vsel %vm879, %v876, %v878
        %v881 = vsel %vm879, %v878, %v876
        %v882 = vsel %vm695, 1, 0
        %v883 = vlaneseq
        %v884 = vshrl.u32 %v883, 7
        %v885 = vsub.s32 0, %v884
        %v886 = vrot.slane %v882, %v885
        %v887 = vlaneseq
        %v888 = vshrl.u32 %v887, 7
        %v889 = vsub.s32 1, %v888
        %v890 = vrot.slane %v882, %v889
        %vm891 = vcmp.eq.s32.totalorder %v886, 1
        %vm892 = vcmp.eq.s32.totalorder %v890, 1
        %v893 = vsel %vm891, %v880, 0.0
        %v894 = vsel %vm892, %v881, 0.0
        %895 = vset.pattern.permute.xlu0 16
        %896 = vperm.xlu0 %895, %v437
        %v897 = vpop.permute.xlu0 %896
        %v899 = vmul.f32 %v897, %v893
        %v900 = vmul.f32 %v897, %v894
        %v901 = vadd.f32 %v873, %v899
        %v902 = vadd.f32 %v874, %v900
        %903 = vrot.lane.b32.xlu0 %v426, 94
        %v904 = vpop.permute.xlu0 %903
        %905 = vrot.lane.b32.xlu0 %v428, 94
        %v906 = vpop.permute.xlu0 %905
        %vm907 = vcmp.lt.s32.totalorder %v443, 94
        %v908 = vsel %vm907, %v904, %v906
        %v909 = vsel %vm907, %v906, %v904
        %vm910 = vmand %vm695, %vm693
        %v911 = vsel %vm910, 1, 0
        %v912 = vlaneseq
        %v913 = vshrl.u32 %v912, 7
        %v914 = vsub.s32 0, %v913
        %v915 = vrot.slane %v911, %v914
        %v916 = vlaneseq
        %v917 = vshrl.u32 %v916, 7
        %v918 = vsub.s32 1, %v917
        %v919 = vrot.slane %v911, %v918
        %vm920 = vcmp.eq.s32.totalorder %v915, 1
        %vm921 = vcmp.eq.s32.totalorder %v919, 1
        %v922 = vsel %vm920, %v908, 0.0
        %v923 = vsel %vm921, %v909, 0.0
        %924 = vset.pattern.permute.xlu0 17
        %925 = vperm.xlu0 %924, %v437
        %v926 = vpop.permute.xlu0 %925
        %v928 = vmul.f32 %v926, %v922
        %v929 = vmul.f32 %v926, %v923
        %v930 = vadd.f32 %v901, %v928
        %v931 = vadd.f32 %v902, %v929
        %932 = vset.pattern.permute.xlu0 1
        %933 = vperm.xlu0 %932, %v677
        %v934 = vpop.permute.xlu0 %933
        %v936 = vadd.f32 %v930, %v934
        %v937 = vadd.f32 %v931, %v934
        %vm938 = vcmp.gt.f32.partialorder %v936, 0.0
        %vm939 = vcmp.gt.f32.partialorder %v937, 0.0
        %v940 = vmul.f32 %v936, 0.01
        %v941 = vmul.f32 %v937, 0.01
        %v942 = vsel %vm938, %v936, %v940
        %v943 = vsel %vm939, %v937, %v941
        %945 = vrot.lane.b32.xlu0 %v691, 124
        %v946 = vpop.permute.xlu0 %945
        %vm947 = vcmask 31744
        %v948 = vsel %vm947, %v946, 0
        %vm950 = vcmask 1043456
        %v952 = vsel %vm950, %v942, 0
        %v955 = vsel %vm950, %v943, 0
        %957 = vmatprep.subr.mxu0 %v955
        %958 = vmatpush1.msra.mxu0 %v952
        %959 = vmatprep.subr.mxu0 0.0
        %960 = vmatpush1.msra.mxu0 0.0
        %961 = vmatprep.subr.mxu0 0.0
        %962 = vmatpush1.msra.mxu0 0.0
        %963 = vmatprep.subr.mxu0 0.0
        %964 = vmatpush1.msra.mxu0 0.0
        %965 = vmatprep.subr.mxu0 0.0
        %966 = vmatpush1.msra.mxu0 0.0
        %967 = vmatprep.subr.mxu0 0.0
        %968 = vmatpush1.msra.mxu0 0.0
        %969 = vmatprep.subr.mxu0 0.0
        %970 = vmatpush1.msra.mxu0 0.0
        %971 = vmatprep.subr.mxu0 0.0
        %972 = vmatpush1.msra.mxu0 0.0
        %973 = vmatprep.subr.mxu0 0.0
        %974 = vmatpush1.msra.mxu0 0.0
        %975 = vmatprep.subr.mxu0 0.0
        %976 = vmatpush1.msra.mxu0 0.0
        %977 = vmatprep.subr.mxu0 0.0
        %978 = vmatpush1.msra.mxu0 0.0
        %979 = vmatprep.subr.mxu0 0.0
        %980 = vmatpush1.msra.mxu0 0.0
        %981 = vmatprep.subr.mxu0 0.0
        %982 = vmatpush1.msra.mxu0 0.0
        %983 = vmatprep.subr.mxu0 0.0
        %984 = vmatpush1.msra.mxu0 0.0
        %985 = vmatprep.subr.mxu0 0.0
        %986 = vmatpush1.msra.mxu0 0.0
        %987 = vmatprep.subr.mxu0 0.0
        %988 = vmatpush1.msra.mxu0 0.0
        %989 = vmatprep.subr.mxu0 0.0
        %990 = vmatpush1.msra.mxu0 0.0
        %991 = vmatprep.subr.mxu0 0.0
        %992 = vmatpush1.msra.mxu0 0.0
        %993 = vmatprep.subr.mxu0 0.0
        %994 = vmatpush1.msra.mxu0 0.0
        %995 = vmatprep.subr.mxu0 0.0
        %996 = vmatpush1.msra.mxu0 0.0
        %997 = vmatprep.subr.mxu0 0.0
        %998 = vmatpush1.msra.mxu0 0.0
        %999 = vmatprep.subr.mxu0 0.0
        %1000 = vmatpush1.msra.mxu0 0.0
        %1001 = vmatprep.subr.mxu0 0.0
        %1002 = vmatpush1.msra.mxu0 0.0
        %1003 = vmatprep.subr.mxu0 0.0
        %1004 = vmatpush1.msra.mxu0 0.0
        %1005 = vmatprep.subr.mxu0 0.0
        %1006 = vmatpush1.msra.mxu0 0.0
        %1007 = vmatprep.subr.mxu0 0.0
        %1008 = vmatpush1.msra.mxu0 0.0
        %1009 = vmatprep.subr.mxu0 0.0
        %1010 = vmatpush1.msra.mxu0 0.0
        %1011 = vmatprep.subr.mxu0 0.0
        %1012 = vmatpush1.msra.mxu0 0.0
        %1013 = vmatprep.subr.mxu0 0.0
        %1014 = vmatpush1.msra.mxu0 0.0
        %1015 = vmatprep.subr.mxu0 0.0
        %1016 = vmatpush1.msra.mxu0 0.0
        %1017 = vmatprep.subr.mxu0 0.0
        %1018 = vmatpush1.msra.mxu0 0.0
        %1019 = vmatprep.subr.mxu0 0.0
        %1020 = vmatpush1.msra.mxu0 0.0
        %1021 = vmatprep.mubr.f32.mxu0 0.0
        %1022 = vmatmul.mubr.f32.gmra.mrb[0].mxu0 %v948
        %v1023 = vpop.f32.mrb[0].mxu0
        %v1024 = vadd.f32 0.0, %v1023
        %v1025 = vpop.f32.mrb[0].mxu0
        %v1026 = vadd.f32 0.0, %v1025
        %1027 = vdwg.mxu0
        %v1028 = vsel %vm947, %v691, 0
        %v1031 = vsel %vm950, %v689, 0
        %v1034 = vsel %vm950, %v690, 0
        %1036 = vmatprep.subr.mxu0 %v1034
        %1037 = vmatpush1.msra.mxu0 %v1031
        %1038 = vmatprep.subr.mxu0 0.0
        %1039 = vmatpush1.msra.mxu0 0.0
        %1040 = vmatprep.subr.mxu0 0.0
        %1041 = vmatpush1.msra.mxu0 0.0
        %1042 = vmatprep.subr.mxu0 0.0
        %1043 = vmatpush1.msra.mxu0 0.0
        %1044 = vmatprep.subr.mxu0 0.0
        %1045 = vmatpush1.msra.mxu0 0.0
        %1046 = vmatprep.subr.mxu0 0.0
        %1047 = vmatpush1.msra.mxu0 0.0
        %1048 = vmatprep.subr.mxu0 0.0
        %1049 = vmatpush1.msra.mxu0 0.0
        %1050 = vmatprep.subr.mxu0 0.0
        %1051 = vmatpush1.msra.mxu0 0.0
        %1052 = vmatprep.subr.mxu0 0.0
        %1053 = vmatpush1.msra.mxu0 0.0
        %1054 = vmatprep.subr.mxu0 0.0
        %1055 = vmatpush1.msra.mxu0 0.0
        %1056 = vmatprep.subr.mxu0 0.0
        %1057 = vmatpush1.msra.mxu0 0.0
        %1058 = vmatprep.subr.mxu0 0.0
        %1059 = vmatpush1.msra.mxu0 0.0
        %1060 = vmatprep.subr.mxu0 0.0
        %1061 = vmatpush1.msra.mxu0 0.0
        %1062 = vmatprep.subr.mxu0 0.0
        %1063 = vmatpush1.msra.mxu0 0.0
        %1064 = vmatprep.subr.mxu0 0.0
        %1065 = vmatpush1.msra.mxu0 0.0
        %1066 = vmatprep.subr.mxu0 0.0
        %1067 = vmatpush1.msra.mxu0 0.0
        %1068 = vmatprep.subr.mxu0 0.0
        %1069 = vmatpush1.msra.mxu0 0.0
        %1070 = vmatprep.subr.mxu0 0.0
        %1071 = vmatpush1.msra.mxu0 0.0
        %1072 = vmatprep.subr.mxu0 0.0
        %1073 = vmatpush1.msra.mxu0 0.0
        %1074 = vmatprep.subr.mxu0 0.0
        %1075 = vmatpush1.msra.mxu0 0.0
        %1076 = vmatprep.subr.mxu0 0.0
        %1077 = vmatpush1.msra.mxu0 0.0
        %1078 = vmatprep.subr.mxu0 0.0
        %1079 = vmatpush1.msra.mxu0 0.0
        %1080 = vmatprep.subr.mxu0 0.0
        %1081 = vmatpush1.msra.mxu0 0.0
        %1082 = vmatprep.subr.mxu0 0.0
        %1083 = vmatpush1.msra.mxu0 0.0
        %1084 = vmatprep.subr.mxu0 0.0
        %1085 = vmatpush1.msra.mxu0 0.0
        %1086 = vmatprep.subr.mxu0 0.0
        %1087 = vmatpush1.msra.mxu0 0.0
        %1088 = vmatprep.subr.mxu0 0.0
        %1089 = vmatpush1.msra.mxu0 0.0
        %1090 = vmatprep.subr.mxu0 0.0
        %1091 = vmatpush1.msra.mxu0 0.0
        %1092 = vmatprep.subr.mxu0 0.0
        %1093 = vmatpush1.msra.mxu0 0.0
        %1094 = vmatprep.subr.mxu0 0.0
        %1095 = vmatpush1.msra.mxu0 0.0
        %1096 = vmatprep.subr.mxu0 0.0
        %1097 = vmatpush1.msra.mxu0 0.0
        %1098 = vmatprep.subr.mxu0 0.0
        %1099 = vmatpush1.msra.mxu0 0.0
        %1100 = vmatprep.mubr.f32.mxu0 0.0
        %1101 = vmatmul.mubr.f32.gmra.mrb[0].mxu0 %v1028
        %v1102 = vpop.f32.mrb[0].mxu0
        %v1103 = vadd.f32 %v1024, %v1102
        %v1104 = vpop.f32.mrb[0].mxu0
        %v1105 = vadd.f32 %v1026, %v1104
        %1106 = vdwg.mxu0
        %vm1107 = vcmp.ge.s32.totalorder %v432, 4
        %vm1108 = vcmp.lt.s32.totalorder %v432, 12
        %vm1109 = vcmp.ge.s32.totalorder %v430, 4
        %vm1110 = vcmp.lt.s32.totalorder %v430, 12
        %1111 = vrot.lane.b32.xlu0 %v426, 68
        %v1112 = vpop.permute.xlu0 %1111
        %1113 = vrot.lane.b32.xlu0 %v428, 68
        %v1114 = vpop.permute.xlu0 %1113
        %vm1115 = vcmp.lt.s32.totalorder %v443, 68
        %v1116 = vsel %vm1115, %v1112, %v1114
        %v1117 = vsel %vm1115, %v1114, %v1112
        %vm1118 = vmand %vm1109, %vm1107
        %v1119 = vsel %vm1118, 1, 0
        %v1120 = vlaneseq
        %v1121 = vshrl.u32 %v1120, 7
        %v1122 = vsub.s32 0, %v1121
        %v1123 = vrot.slane %v1119, %v1122
        %v1124 = vlaneseq
        %v1125 = vshrl.u32 %v1124, 7
        %v1126 = vsub.s32 1, %v1125
        %v1127 = vrot.slane %v1119, %v1126
        %vm1128 = vcmp.eq.s32.totalorder %v1123, 1
        %vm1129 = vcmp.eq.s32.totalorder %v1127, 1
        %v1130 = vsel %vm1128, %v1117, 0.0
        %v1131 = vsel %vm1129, %v1116, 0.0
        %1132 = vset.pattern.permute.xlu0 18
        %1133 = vperm.xlu0 %1132, %v437
        %v1134 = vpop.permute.xlu0 %1133
        %v1136 = vmul.f32 %v1134, %v1130
        %v1137 = vmul.f32 %v1134, %v1131
        %v1138 = vadd.f32 %v1136, 0.0
        %v1139 = vadd.f32 %v1137, 0.0
        %1140 = vrot.lane.b32.xlu0 %v426, 64
        %v1141 = vpop.permute.xlu0 %1140
        %1142 = vrot.lane.b32.xlu0 %v428, 64
        %v1143 = vpop.permute.xlu0 %1142
        %vm1144 = vcmp.lt.s32.totalorder %v443, 64
        %v1145 = vsel %vm1144, %v1141, %v1143
        %v1146 = vsel %vm1144, %v1143, %v1141
        %v1147 = vsel %vm1109, 1, 0
        %v1148 = vlaneseq
        %v1149 = vshrl.u32 %v1148, 7
        %v1150 = vsub.s32 0, %v1149
        %v1151 = vrot.slane %v1147, %v1150
        %v1152 = vlaneseq
        %v1153 = vshrl.u32 %v1152, 7
        %v1154 = vsub.s32 1, %v1153
        %v1155 = vrot.slane %v1147, %v1154
        %vm1156 = vcmp.eq.s32.totalorder %v1151, 1
        %vm1157 = vcmp.eq.s32.totalorder %v1155, 1
        %v1158 = vsel %vm1156, %v1146, 0.0
        %v1159 = vsel %vm1157, %v1145, 0.0
        %1160 = vset.pattern.permute.xlu0 19
        %1161 = vperm.xlu0 %1160, %v437
        %v1162 = vpop.permute.xlu0 %1161
        %v1164 = vmul.f32 %v1162, %v1158
        %v1165 = vmul.f32 %v1162, %v1159
        %v1166 = vadd.f32 %v1138, %v1164
        %v1167 = vadd.f32 %v1139, %v1165
        %1168 = vrot.lane.b32.xlu0 %v426, 60
        %v1169 = vpop.permute.xlu0 %1168
        %1170 = vrot.lane.b32.xlu0 %v428, 60
        %v1171 = vpop.permute.xlu0 %1170
        %vm1172 = vcmp.lt.s32.totalorder %v443, 60
        %v1173 = vsel %vm1172, %v1169, %v1171
        %v1174 = vsel %vm1172, %v1171, %v1169
        %vm1175 = vmand %vm1109, %vm1108
        %v1176 = vsel %vm1175, 1, 0
        %v1177 = vlaneseq
        %v1178 = vshrl.u32 %v1177, 7
        %v1179 = vsub.s32 0, %v1178
        %v1180 = vrot.slane %v1176, %v1179
        %v1181 = vlaneseq
        %v1182 = vshrl.u32 %v1181, 7
        %v1183 = vsub.s32 1, %v1182
        %v1184 = vrot.slane %v1176, %v1183
        %vm1185 = vcmp.eq.s32.totalorder %v1180, 1
        %vm1186 = vcmp.eq.s32.totalorder %v1184, 1
        %v1187 = vsel %vm1185, %v1174, 0.0
        %v1188 = vsel %vm1186, %v1173, 0.0
        %1189 = vset.pattern.permute.xlu0 20
        %1190 = vperm.xlu0 %1189, %v437
        %v1191 = vpop.permute.xlu0 %1190
        %v1193 = vmul.f32 %v1191, %v1187
        %v1194 = vmul.f32 %v1191, %v1188
        %v1195 = vadd.f32 %v1166, %v1193
        %v1196 = vadd.f32 %v1167, %v1194
        %1197 = vrot.lane.b32.xlu0 %v426, 4
        %v1198 = vpop.permute.xlu0 %1197
        %1199 = vrot.lane.b32.xlu0 %v428, 4
        %v1200 = vpop.permute.xlu0 %1199
        %vm1201 = vcmp.lt.s32.totalorder %v443, 4
        %v1202 = vsel %vm1201, %v1198, %v1200
        %v1203 = vsel %vm1201, %v1200, %v1198
        %v1204 = vsel %vm1107, 1, 0
        %v1205 = vlaneseq
        %v1206 = vshrl.u32 %v1205, 7
        %v1207 = vsub.s32 0, %v1206
        %v1208 = vrot.slane %v1204, %v1207
        %v1209 = vlaneseq
        %v1210 = vshrl.u32 %v1209, 7
        %v1211 = vsub.s32 1, %v1210
        %v1212 = vrot.slane %v1204, %v1211
        %vm1213 = vcmp.eq.s32.totalorder %v1208, 1
        %vm1214 = vcmp.eq.s32.totalorder %v1212, 1
        %v1215 = vsel %vm1213, %v1203, 0.0
        %v1216 = vsel %vm1214, %v1202, 0.0
        %1217 = vset.pattern.permute.xlu0 21
        %1218 = vperm.xlu0 %1217, %v437
        %v1219 = vpop.permute.xlu0 %1218
        %v1221 = vmul.f32 %v1219, %v1215
        %v1222 = vmul.f32 %v1219, %v1216
        %v1223 = vadd.f32 %v1195, %v1221
        %v1224 = vadd.f32 %v1196, %v1222
        %1225 = vset.pattern.permute.xlu0 22
        %1226 = vperm.xlu0 %1225, %v437
        %v1227 = vpop.permute.xlu0 %1226
        %v1229 = vmul.f32 %v1227, %v426
        %v1230 = vmul.f32 %v1227, %v428
        %v1231 = vadd.f32 %v1223, %v1229
        %v1232 = vadd.f32 %v1224, %v1230
        %1233 = vrot.lane.b32.xlu0 %v426, 124
        %v1234 = vpop.permute.xlu0 %1233
        %1235 = vrot.lane.b32.xlu0 %v428, 124
        %v1236 = vpop.permute.xlu0 %1235
        %vm1237 = vcmp.lt.s32.totalorder %v443, 124
        %v1238 = vsel %vm1237, %v1234, %v1236
        %v1239 = vsel %vm1237, %v1236, %v1234
        %v1240 = vsel %vm1108, 1, 0
        %v1241 = vlaneseq
        %v1242 = vshrl.u32 %v1241, 7
        %v1243 = vsub.s32 0, %v1242
        %v1244 = vrot.slane %v1240, %v1243
        %v1245 = vlaneseq
        %v1246 = vshrl.u32 %v1245, 7
        %v1247 = vsub.s32 1, %v1246
        %v1248 = vrot.slane %v1240, %v1247
        %vm1249 = vcmp.eq.s32.totalorder %v1244, 1
        %vm1250 = vcmp.eq.s32.totalorder %v1248, 1
        %v1251 = vsel %vm1249, %v1238, 0.0
        %v1252 = vsel %vm1250, %v1239, 0.0
        %1253 = vset.pattern.permute.xlu0 23
        %1254 = vperm.xlu0 %1253, %v437
        %v1255 = vpop.permute.xlu0 %1254
        %v1257 = vmul.f32 %v1255, %v1251
        %v1258 = vmul.f32 %v1255, %v1252
        %v1259 = vadd.f32 %v1231, %v1257
        %v1260 = vadd.f32 %v1232, %v1258
        %vm1261 = vmand %vm1110, %vm1107
        %v1262 = vsel %vm1261, 1, 0
        %v1263 = vlaneseq
        %v1264 = vshrl.u32 %v1263, 7
        %v1265 = vsub.s32 0, %v1264
        %v1266 = vrot.slane %v1262, %v1265
        %v1267 = vlaneseq
        %v1268 = vshrl.u32 %v1267, 7
        %v1269 = vsub.s32 1, %v1268
        %v1270 = vrot.slane %v1262, %v1269
        %vm1271 = vcmp.eq.s32.totalorder %v1266, 1
        %vm1272 = vcmp.eq.s32.totalorder %v1270, 1
        %v1273 = vsel %vm1271, %v1116, 0.0
        %v1274 = vsel %vm1272, %v1117, 0.0
        %1275 = vset.pattern.permute.xlu0 24
        %1276 = vperm.xlu0 %1275, %v437
        %v1277 = vpop.permute.xlu0 %1276
        %v1279 = vmul.f32 %v1277, %v1273
        %v1280 = vmul.f32 %v1277, %v1274
        %v1281 = vadd.f32 %v1259, %v1279
        %v1282 = vadd.f32 %v1260, %v1280
        %v1283 = vsel %vm1110, 1, 0
        %v1284 = vlaneseq
        %v1285 = vshrl.u32 %v1284, 7
        %v1286 = vsub.s32 0, %v1285
        %v1287 = vrot.slane %v1283, %v1286
        %v1288 = vlaneseq
        %v1289 = vshrl.u32 %v1288, 7
        %v1290 = vsub.s32 1, %v1289
        %v1291 = vrot.slane %v1283, %v1290
        %vm1292 = vcmp.eq.s32.totalorder %v1287, 1
        %vm1293 = vcmp.eq.s32.totalorder %v1291, 1
        %v1294 = vsel %vm1292, %v1145, 0.0
        %v1295 = vsel %vm1293, %v1146, 0.0
        %1296 = vset.pattern.permute.xlu0 25
        %1297 = vperm.xlu0 %1296, %v437
        %v1298 = vpop.permute.xlu0 %1297
        %v1300 = vmul.f32 %v1298, %v1294
        %v1301 = vmul.f32 %v1298, %v1295
        %v1302 = vadd.f32 %v1281, %v1300
        %v1303 = vadd.f32 %v1282, %v1301
        %vm1304 = vmand %vm1110, %vm1108
        %v1305 = vsel %vm1304, 1, 0
        %v1306 = vlaneseq
        %v1307 = vshrl.u32 %v1306, 7
        %v1308 = vsub.s32 0, %v1307
        %v1309 = vrot.slane %v1305, %v1308
        %v1310 = vlaneseq
        %v1311 = vshrl.u32 %v1310, 7
        %v1312 = vsub.s32 1, %v1311
        %v1313 = vrot.slane %v1305, %v1312
        %vm1314 = vcmp.eq.s32.totalorder %v1309, 1
        %vm1315 = vcmp.eq.s32.totalorder %v1313, 1
        %v1316 = vsel %vm1314, %v1173, 0.0
        %v1317 = vsel %vm1315, %v1174, 0.0
        %1318 = vset.pattern.permute.xlu0 26
        %1319 = vperm.xlu0 %1318, %v437
        %v1320 = vpop.permute.xlu0 %1319
        %v1322 = vmul.f32 %v1320, %v1316
        %v1323 = vmul.f32 %v1320, %v1317
        %v1324 = vadd.f32 %v1302, %v1322
        %v1325 = vadd.f32 %v1303, %v1323
        %1326 = vset.pattern.permute.xlu0 2
        %1327 = vperm.xlu0 %1326, %v677
        %v1328 = vpop.permute.xlu0 %1327
        %v1330 = vadd.f32 %v1324, %v1328
        %v1331 = vadd.f32 %v1325, %v1328
        %vm1332 = vcmp.gt.f32.partialorder %v1330, 0.0
        %vm1333 = vcmp.gt.f32.partialorder %v1331, 0.0
        %v1334 = vmul.f32 %v1330, 0.01
        %v1335 = vmul.f32 %v1331, 0.01
        %v1336 = vsel %vm1332, %v1330, %v1334
        %v1337 = vsel %vm1333, %v1331, %v1335
        %1338 = vrot.lane.b32.xlu0 %v691, 120
        %v1339 = vpop.permute.xlu0 %1338
        %v1340 = vsel %vm947, %v1339, 0
        %v1343 = vsel %vm950, %v1336, 0
        %v1346 = vsel %vm950, %v1337, 0
        %1348 = vmatprep.subr.mxu0 %v1346
        %1349 = vmatpush1.msra.mxu0 %v1343
        %1350 = vmatprep.subr.mxu0 0.0
        %1351 = vmatpush1.msra.mxu0 0.0
        %1352 = vmatprep.subr.mxu0 0.0
        %1353 = vmatpush1.msra.mxu0 0.0
        %1354 = vmatprep.subr.mxu0 0.0
        %1355 = vmatpush1.msra.mxu0 0.0
        %1356 = vmatprep.subr.mxu0 0.0
        %1357 = vmatpush1.msra.mxu0 0.0
        %1358 = vmatprep.subr.mxu0 0.0
        %1359 = vmatpush1.msra.mxu0 0.0
        %1360 = vmatprep.subr.mxu0 0.0
        %1361 = vmatpush1.msra.mxu0 0.0
        %1362 = vmatprep.subr.mxu0 0.0
        %1363 = vmatpush1.msra.mxu0 0.0
        %1364 = vmatprep.subr.mxu0 0.0
        %1365 = vmatpush1.msra.mxu0 0.0
        %1366 = vmatprep.subr.mxu0 0.0
        %1367 = vmatpush1.msra.mxu0 0.0
        %1368 = vmatprep.subr.mxu0 0.0
        %1369 = vmatpush1.msra.mxu0 0.0
        %1370 = vmatprep.subr.mxu0 0.0
        %1371 = vmatpush1.msra.mxu0 0.0
        %1372 = vmatprep.subr.mxu0 0.0
        %1373 = vmatpush1.msra.mxu0 0.0
        %1374 = vmatprep.subr.mxu0 0.0
        %1375 = vmatpush1.msra.mxu0 0.0
        %1376 = vmatprep.subr.mxu0 0.0
        %1377 = vmatpush1.msra.mxu0 0.0
        %1378 = vmatprep.subr.mxu0 0.0
        %1379 = vmatpush1.msra.mxu0 0.0
        %1380 = vmatprep.subr.mxu0 0.0
        %1381 = vmatpush1.msra.mxu0 0.0
        %1382 = vmatprep.subr.mxu0 0.0
        %1383 = vmatpush1.msra.mxu0 0.0
        %1384 = vmatprep.subr.mxu0 0.0
        %1385 = vmatpush1.msra.mxu0 0.0
        %1386 = vmatprep.subr.mxu0 0.0
        %1387 = vmatpush1.msra.mxu0 0.0
        %1388 = vmatprep.subr.mxu0 0.0
        %1389 = vmatpush1.msra.mxu0 0.0
        %1390 = vmatprep.subr.mxu0 0.0
        %1391 = vmatpush1.msra.mxu0 0.0
        %1392 = vmatprep.subr.mxu0 0.0
        %1393 = vmatpush1.msra.mxu0 0.0
        %1394 = vmatprep.subr.mxu0 0.0
        %1395 = vmatpush1.msra.mxu0 0.0
        %1396 = vmatprep.subr.mxu0 0.0
        %1397 = vmatpush1.msra.mxu0 0.0
        %1398 = vmatprep.subr.mxu0 0.0
        %1399 = vmatpush1.msra.mxu0 0.0
        %1400 = vmatprep.subr.mxu0 0.0
        %1401 = vmatpush1.msra.mxu0 0.0
        %1402 = vmatprep.subr.mxu0 0.0
        %1403 = vmatpush1.msra.mxu0 0.0
        %1404 = vmatprep.subr.mxu0 0.0
        %1405 = vmatpush1.msra.mxu0 0.0
        %1406 = vmatprep.subr.mxu0 0.0
        %1407 = vmatpush1.msra.mxu0 0.0
        %1408 = vmatprep.subr.mxu0 0.0
        %1409 = vmatpush1.msra.mxu0 0.0
        %1410 = vmatprep.subr.mxu0 0.0
        %1411 = vmatpush1.msra.mxu0 0.0
        %1412 = vmatprep.mubr.f32.mxu0 0.0
        %1413 = vmatmul.mubr.f32.gmra.mrb[0].mxu0 %v1340
        %v1414 = vpop.f32.mrb[0].mxu0
        %v1415 = vadd.f32 0.0, %v1414
        %v1416 = vpop.f32.mrb[0].mxu0
        %v1417 = vadd.f32 0.0, %v1416
        %1418 = vdwg.mxu0
        %v1419 = vadd.f32 %v1103, %v1415
        %v1420 = vadd.f32 %v1105, %v1417
        %vm1421 = vcmp.ge.s32.totalorder %v432, 8
        %vm1422 = vcmp.lt.s32.totalorder %v432, 8
        %vm1423 = vcmp.ge.s32.totalorder %v430, 8
        %vm1424 = vcmp.lt.s32.totalorder %v430, 8
        %1425 = vrot.lane.b32.xlu0 %v426, 8
        %v1426 = vpop.permute.xlu0 %1425
        %1427 = vrot.lane.b32.xlu0 %v428, 8
        %v1428 = vpop.permute.xlu0 %1427
        %vm1429 = vcmp.lt.s32.totalorder %v443, 8
        %v1430 = vsel %vm1429, %v1426, %v1428
        %v1431 = vsel %vm1429, %v1428, %v1426
        %vm1432 = vmand %vm1423, %vm1421
        %v1433 = vsel %vm1432, 1, 0
        %v1434 = vlaneseq
        %v1435 = vshrl.u32 %v1434, 7
        %v1436 = vsub.s32 0, %v1435
        %v1437 = vrot.slane %v1433, %v1436
        %v1438 = vlaneseq
        %v1439 = vshrl.u32 %v1438, 7
        %v1440 = vsub.s32 1, %v1439
        %v1441 = vrot.slane %v1433, %v1440
        %vm1442 = vcmp.eq.s32.totalorder %v1437, 1
        %vm1443 = vcmp.eq.s32.totalorder %v1441, 1
        %v1444 = vsel %vm1442, %v1430, 0.0
        %v1445 = vsel %vm1443, %v1431, 0.0
        %1446 = vset.pattern.permute.xlu0 27
        %1447 = vperm.xlu0 %1446, %v437
        %v1448 = vpop.permute.xlu0 %1447
        %v1450 = vmul.f32 %v1448, %v1444
        %v1451 = vmul.f32 %v1448, %v1445
        %v1452 = vadd.f32 %v1450, 0.0
        %v1453 = vadd.f32 %v1451, 0.0
        %v1454 = vsel %vm1423, 1, 0
        %v1455 = vlaneseq
        %v1456 = vshrl.u32 %v1455, 7
        %v1457 = vsub.s32 0, %v1456
        %v1458 = vrot.slane %v1454, %v1457
        %v1459 = vlaneseq
        %v1460 = vshrl.u32 %v1459, 7
        %v1461 = vsub.s32 1, %v1460
        %v1462 = vrot.slane %v1454, %v1461
        %vm1463 = vcmp.eq.s32.totalorder %v1458, 1
        %vm1464 = vcmp.eq.s32.totalorder %v1462, 1
        %v1465 = vsel %vm1463, %v428, 0.0
        %v1466 = vsel %vm1464, %v426, 0.0
        %1467 = vset.pattern.permute.xlu0 28
        %1468 = vperm.xlu0 %1467, %v437
        %v1469 = vpop.permute.xlu0 %1468
        %v1471 = vmul.f32 %v1469, %v1465
        %v1472 = vmul.f32 %v1469, %v1466
        %v1473 = vadd.f32 %v1452, %v1471
        %v1474 = vadd.f32 %v1453, %v1472
        %1475 = vrot.lane.b32.xlu0 %v426, 120
        %v1476 = vpop.permute.xlu0 %1475
        %1477 = vrot.lane.b32.xlu0 %v428, 120
        %v1478 = vpop.permute.xlu0 %1477
        %vm1479 = vcmp.lt.s32.totalorder %v443, 120
        %v1480 = vsel %vm1479, %v1476, %v1478
        %v1481 = vsel %vm1479, %v1478, %v1476
        %vm1482 = vmand %vm1423, %vm1422
        %v1483 = vsel %vm1482, 1, 0
        %v1484 = vlaneseq
        %v1485 = vshrl.u32 %v1484, 7
        %v1486 = vsub.s32 0, %v1485
        %v1487 = vrot.slane %v1483, %v1486
        %v1488 = vlaneseq
        %v1489 = vshrl.u32 %v1488, 7
        %v1490 = vsub.s32 1, %v1489
        %v1491 = vrot.slane %v1483, %v1490
        %vm1492 = vcmp.eq.s32.totalorder %v1487, 1
        %vm1493 = vcmp.eq.s32.totalorder %v1491, 1
        %v1494 = vsel %vm1492, %v1481, 0.0
        %v1495 = vsel %vm1493, %v1480, 0.0
        %1496 = vset.pattern.permute.xlu0 29
        %1497 = vperm.xlu0 %1496, %v437
        %v1498 = vpop.permute.xlu0 %1497
        %v1500 = vmul.f32 %v1498, %v1494
        %v1501 = vmul.f32 %v1498, %v1495
        %v1502 = vadd.f32 %v1473, %v1500
        %v1503 = vadd.f32 %v1474, %v1501
        %v1504 = vsel %vm1421, 1, 0
        %v1505 = vlaneseq
        %v1506 = vshrl.u32 %v1505, 7
        %v1507 = vsub.s32 0, %v1506
        %v1508 = vrot.slane %v1504, %v1507
        %v1509 = vlaneseq
        %v1510 = vshrl.u32 %v1509, 7
        %v1511 = vsub.s32 1, %v1510
        %v1512 = vrot.slane %v1504, %v1511
        %vm1513 = vcmp.eq.s32.totalorder %v1508, 1
        %vm1514 = vcmp.eq.s32.totalorder %v1512, 1
        %v1515 = vsel %vm1513, %v1431, 0.0
        %v1516 = vsel %vm1514, %v1430, 0.0
        %1517 = vset.pattern.permute.xlu0 30
        %1518 = vperm.xlu0 %1517, %v437
        %v1519 = vpop.permute.xlu0 %1518
        %v1521 = vmul.f32 %v1519, %v1515
        %v1522 = vmul.f32 %v1519, %v1516
        %v1523 = vadd.f32 %v1502, %v1521
        %v1524 = vadd.f32 %v1503, %v1522
        %1525 = vset.pattern.permute.xlu0 31
        %1526 = vperm.xlu0 %1525, %v437
        %v1527 = vpop.permute.xlu0 %1526
        %v1529 = vmul.f32 %v1527, %v426
        %v1530 = vmul.f32 %v1527, %v428
        %v1531 = vadd.f32 %v1523, %v1529
        %v1532 = vadd.f32 %v1524, %v1530
        %v1533 = vsel %vm1422, 1, 0
        %v1534 = vlaneseq
        %v1535 = vshrl.u32 %v1534, 7
        %v1536 = vsub.s32 0, %v1535
        %v1537 = vrot.slane %v1533, %v1536
        %v1538 = vlaneseq
        %v1539 = vshrl.u32 %v1538, 7
        %v1540 = vsub.s32 1, %v1539
        %v1541 = vrot.slane %v1533, %v1540
        %vm1542 = vcmp.eq.s32.totalorder %v1537, 1
        %vm1543 = vcmp.eq.s32.totalorder %v1541, 1
        %v1544 = vsel %vm1542, %v1480, 0.0
        %v1545 = vsel %vm1543, %v1481, 0.0
        %1546 = vset.pattern.permute.xlu0 32
        %1547 = vperm.xlu0 %1546, %v437
        %v1548 = vpop.permute.xlu0 %1547
        %v1550 = vmul.f32 %v1548, %v1544
        %v1551 = vmul.f32 %v1548, %v1545
        %v1552 = vadd.f32 %v1531, %v1550
        %v1553 = vadd.f32 %v1532, %v1551
        %vm1554 = vmand %vm1424, %vm1421
        %v1555 = vsel %vm1554, 1, 0
        %v1556 = vlaneseq
        %v1557 = vshrl.u32 %v1556, 7
        %v1558 = vsub.s32 0, %v1557
        %v1559 = vrot.slane %v1555, %v1558
        %v1560 = vlaneseq
        %v1561 = vshrl.u32 %v1560, 7
        %v1562 = vsub.s32 1, %v1561
        %v1563 = vrot.slane %v1555, %v1562
        %vm1564 = vcmp.eq.s32.totalorder %v1559, 1
        %vm1565 = vcmp.eq.s32.totalorder %v1563, 1
        %v1566 = vsel %vm1564, %v1430, 0.0
        %v1567 = vsel %vm1565, %v1431, 0.0
        %1568 = vset.pattern.permute.xlu0 33
        %1569 = vperm.xlu0 %1568, %v437
        %v1570 = vpop.permute.xlu0 %1569
        %v1572 = vmul.f32 %v1570, %v1566
        %v1573 = vmul.f32 %v1570, %v1567
        %v1574 = vadd.f32 %v1552, %v1572
        %v1575 = vadd.f32 %v1553, %v1573
        %v1576 = vsel %vm1424, 1, 0
        %v1577 = vlaneseq
        %v1578 = vshrl.u32 %v1577, 7
        %v1579 = vsub.s32 0, %v1578
        %v1580 = vrot.slane %v1576, %v1579
        %v1581 = vlaneseq
        %v1582 = vshrl.u32 %v1581, 7
        %v1583 = vsub.s32 1, %v1582
        %v1584 = vrot.slane %v1576, %v1583
        %vm1585 = vcmp.eq.s32.totalorder %v1580, 1
        %vm1586 = vcmp.eq.s32.totalorder %v1584, 1
        %v1587 = vsel %vm1585, %v428, 0.0
        %v1588 = vsel %vm1586, %v426, 0.0
        %1589 = vset.pattern.permute.xlu0 34
        %1590 = vperm.xlu0 %1589, %v437
        %v1591 = vpop.permute.xlu0 %1590
        %v1593 = vmul.f32 %v1591, %v1587
        %v1594 = vmul.f32 %v1591, %v1588
        %v1595 = vadd.f32 %v1574, %v1593
        %v1596 = vadd.f32 %v1575, %v1594
        %vm1597 = vmand %vm1424, %vm1422
        %v1598 = vsel %vm1597, 1, 0
        %v1599 = vlaneseq
        %v1600 = vshrl.u32 %v1599, 7
        %v1601 = vsub.s32 0, %v1600
        %v1602 = vrot.slane %v1598, %v1601
        %v1603 = vlaneseq
        %v1604 = vshrl.u32 %v1603, 7
        %v1605 = vsub.s32 1, %v1604
        %v1606 = vrot.slane %v1598, %v1605
        %vm1607 = vcmp.eq.s32.totalorder %v1602, 1
        %vm1608 = vcmp.eq.s32.totalorder %v1606, 1
        %v1609 = vsel %vm1607, %v1481, 0.0
        %v1610 = vsel %vm1608, %v1480, 0.0
        %1611 = vset.pattern.permute.xlu0 35
        %1612 = vperm.xlu0 %1611, %v437
        %v1613 = vpop.permute.xlu0 %1612
        %v1615 = vmul.f32 %v1613, %v1609
        %v1616 = vmul.f32 %v1613, %v1610
        %v1617 = vadd.f32 %v1595, %v1615
        %v1618 = vadd.f32 %v1596, %v1616
        %1619 = vset.pattern.permute.xlu0 3
        %1620 = vperm.xlu0 %1619, %v677
        %v1621 = vpop.permute.xlu0 %1620
        %v1623 = vadd.f32 %v1617, %v1621
        %v1624 = vadd.f32 %v1618, %v1621
        %vm1625 = vcmp.gt.f32.partialorder %v1623, 0.0
        %vm1626 = vcmp.gt.f32.partialorder %v1624, 0.0
        %v1627 = vmul.f32 %v1623, 0.01
        %v1628 = vmul.f32 %v1624, 0.01
        %v1629 = vsel %vm1625, %v1623, %v1627
        %v1630 = vsel %vm1626, %v1624, %v1628
        %1631 = vrot.lane.b32.xlu0 %v691, 116
        %v1632 = vpop.permute.xlu0 %1631
        %v1633 = vsel %vm947, %v1632, 0
        %v1636 = vsel %vm950, %v1629, 0
        %v1639 = vsel %vm950, %v1630, 0
        %1641 = vmatprep.subr.mxu0 %v1639
        %1642 = vmatpush1.msra.mxu0 %v1636
        %1643 = vmatprep.subr.mxu0 0.0
        %1644 = vmatpush1.msra.mxu0 0.0
        %1645 = vmatprep.subr.mxu0 0.0
        %1646 = vmatpush1.msra.mxu0 0.0
        %1647 = vmatprep.subr.mxu0 0.0
        %1648 = vmatpush1.msra.mxu0 0.0
        %1649 = vmatprep.subr.mxu0 0.0
        %1650 = vmatpush1.msra.mxu0 0.0
        %1651 = vmatprep.subr.mxu0 0.0
        %1652 = vmatpush1.msra.mxu0 0.0
        %1653 = vmatprep.subr.mxu0 0.0
        %1654 = vmatpush1.msra.mxu0 0.0
        %1655 = vmatprep.subr.mxu0 0.0
        %1656 = vmatpush1.msra.mxu0 0.0
        %1657 = vmatprep.subr.mxu0 0.0
        %1658 = vmatpush1.msra.mxu0 0.0
        %1659 = vmatprep.subr.mxu0 0.0
        %1660 = vmatpush1.msra.mxu0 0.0
        %1661 = vmatprep.subr.mxu0 0.0
        %1662 = vmatpush1.msra.mxu0 0.0
        %1663 = vmatprep.subr.mxu0 0.0
        %1664 = vmatpush1.msra.mxu0 0.0
        %1665 = vmatprep.subr.mxu0 0.0
        %1666 = vmatpush1.msra.mxu0 0.0
        %1667 = vmatprep.subr.mxu0 0.0
        %1668 = vmatpush1.msra.mxu0 0.0
        %1669 = vmatprep.subr.mxu0 0.0
        %1670 = vmatpush1.msra.mxu0 0.0
        %1671 = vmatprep.subr.mxu0 0.0
        %1672 = vmatpush1.msra.mxu0 0.0
        %1673 = vmatprep.subr.mxu0 0.0
        %1674 = vmatpush1.msra.mxu0 0.0
        %1675 = vmatprep.subr.mxu0 0.0
        %1676 = vmatpush1.msra.mxu0 0.0
        %1677 = vmatprep.subr.mxu0 0.0
        %1678 = vmatpush1.msra.mxu0 0.0
        %1679 = vmatprep.subr.mxu0 0.0
        %1680 = vmatpush1.msra.mxu0 0.0
        %1681 = vmatprep.subr.mxu0 0.0
        %1682 = vmatpush1.msra.mxu0 0.0
        %1683 = vmatprep.subr.mxu0 0.0
        %1684 = vmatpush1.msra.mxu0 0.0
        %1685 = vmatprep.subr.mxu0 0.0
        %1686 = vmatpush1.msra.mxu0 0.0
        %1687 = vmatprep.subr.mxu0 0.0
        %1688 = vmatpush1.msra.mxu0 0.0
        %1689 = vmatprep.subr.mxu0 0.0
        %1690 = vmatpush1.msra.mxu0 0.0
        %1691 = vmatprep.subr.mxu0 0.0
        %1692 = vmatpush1.msra.mxu0 0.0
        %1693 = vmatprep.subr.mxu0 0.0
        %1694 = vmatpush1.msra.mxu0 0.0
        %1695 = vmatprep.subr.mxu0 0.0
        %1696 = vmatpush1.msra.mxu0 0.0
        %1697 = vmatprep.subr.mxu0 0.0
        %1698 = vmatpush1.msra.mxu0 0.0
        %1699 = vmatprep.subr.mxu0 0.0
        %1700 = vmatpush1.msra.mxu0 0.0
        %1701 = vmatprep.subr.mxu0 0.0
        %1702 = vmatpush1.msra.mxu0 0.0
        %1703 = vmatprep.subr.mxu0 0.0
        %1704 = vmatpush1.msra.mxu0 0.0
        %1705 = vmatprep.mubr.f32.mxu0 0.0
        %1706 = vmatmul.mubr.f32.gmra.mrb[0].mxu0 %v1633
        %v1707 = vpop.f32.mrb[0].mxu0
        %v1708 = vadd.f32 0.0, %v1707
        %v1709 = vpop.f32.mrb[0].mxu0
        %v1710 = vadd.f32 0.0, %v1709
        %1711 = vdwg.mxu0
        %v1712 = vadd.f32 %v1419, %v1708
        %v1713 = vadd.f32 %v1420, %v1710
        %v1714 = vld [vmem:[%s7] sm:$0xff]
        %1716 = vset.pattern.permute.xlu0 0
        %1717 = vperm.xlu0 %1716, %v1714
        %v1718 = vpop.permute.xlu0 %1717
        %v1720 = vadd.f32 %v1712, %v1718
        %v1721 = vadd.f32 %v1713, %v1718
        %vm1722 = vcmp.gt.f32.partialorder %v1720, 0.0
        %vm1723 = vcmp.gt.f32.partialorder %v1721, 0.0
        %v1724 = vmul.f32 %v1720, 0.01
        %v1725 = vmul.f32 %v1721, 0.01
        %v1726 = vsel %vm1722, %v1720, %v1724
        %v1727 = vsel %vm1723, %v1721, %v1725
        %v1728 = vadd.f32 %v1726, %v346
        %v1729 = vadd.f32 %v1727, %v347
        %1730 = vst [vmem:[%s337] sm:$0xff] %v1728
        %1731 = vst [vmem:[%s337 + $0x8] sm:$0xff] %v1729
        %s1732 = sand.u32 %s211, 1
        %s1733 = scalar_lea.sflag [#allocation4], %s1732
        %s1734 = sand.u32 %s211, 1
        %s1735 = smul.addr %s1734, 16
        %s1736 = scalar_lea.vmem [#allocation5], %s1735
        // Predicated region
        $region57: #{tpu_custom_call.1} parent=51 // pred_check
          %p1737 = pneg %p221
        $region58: #{tpu_custom_call.1} parent=51 // pred_check_branch
          %1739 = sbr.rel (%p1737) target = $region60
        $region59: #{tpu_custom_call.1} parent=51 // pred_region
          %s1740 = smul.u32 2, %s25
          %s1742 = ssub.s32 256, 256
          %1743 = vsyncadd %s1733, %s1742
          %s1744 = smul.addr %s1740, 128
          %s1745 = scalar_lea.hbm %s8, %s1744
          %s1747 = sshll.u32 %s1736, 4
          %s1748 = int_to_ptr.vmem [resolvable:$true] %s1747
          %1750 = dma.vmem_to_hbm [thread:$0]  %s1748, 256, %s1745, %s1733
        $region60: #{tpu_custom_call.1} parent=51 // pred_fallthru
          _
      $region52: #{tpu_custom_call.1} parent=5 // pred_fallthru
        _
      %p1751 = scmp.le.s32.totalorder 2, %s20
      // Predicated region
      $region61: #{tpu_custom_call.1} parent=5 // pred_check
        %p1752 = pneg %p1751
      $region62: #{tpu_custom_call.1} parent=5 // pred_check_branch
        %1754 = sbr.rel (%p1752) target = $region64
      $region63: #{tpu_custom_call.1} parent=5 // pred_region
        %s1755 = ssub.s32 %s20, 2
        // Predicated region
        $region65: #{tpu_custom_call.1} parent=63 // pred_check
          %p1756 = pneg %p227
        $region66: #{tpu_custom_call.1} parent=63 // pred_check_branch
          %1758 = sbr.rel (%p1756) target = $region68
        $region67: #{tpu_custom_call.1} parent=63 // pred_region
          %s1759 = sand.u32 %s212, 1
          %s1760 = scalar_lea.sflag [#allocation4], %s1759
          %s1761 = sand.u32 %s212, 1
          %s1762 = smul.addr %s1761, 16
          %s1763 = scalar_lea.vmem [#allocation5], %s1762
          %1764 = dma.done %s1760, 256
        $region68: #{tpu_custom_call.1} parent=63 // pred_fallthru
          _
      $region64: #{tpu_custom_call.1} parent=5 // pred_fallthru
        _
    $region6: #{tpu_custom_call.1} parent=1 // loop_footer
      %s24 = sadd.s32 1, %s20
    $region7: #{tpu_custom_call.1} parent=1 // loop_footer_branch
      %19 = sbr.rel target = $region3
    $region8: #{tpu_custom_call.1} parent=1 // loop_exit
      _
    %1765 = vsyncpa [#allocation3], 1
    %s1766 = scalar_lea.sflag [#allocation3], 1
    %1767 = vsyncpa %s1766, 1
    %1768 = vsyncpa [#allocation4], 1
    %s1769 = scalar_lea.sflag [#allocation4], 1
    %1770 = vsyncpa %s1769, 1

</llo_original>
